<compile_context>
chip_gen: v6e
topology: v6e:2x2x1
jax: 0.10.0
libtpu: 0.0.40
codegen_flags: <defaults>
</compile_context>

<pallas_src>
import functools

import jax
import jax.numpy as jnp
import numpy as np
from jax.experimental import pallas as pl
from jax.experimental.pallas import tpu as pltpu


# --------------------------------------------------------------------------- #
# Kernel
# --------------------------------------------------------------------------- #
def decoder_block_kernel(z_ref, mask_ref, w1_ref, w2_ref, b1_ref, b2_ref,
                         o_ref, *, W):
    # z_ref   : (1, C2, HWb)         concat(x, y); pixels (possibly N images) in lanes
    # mask_ref: (9, HWb)             precomputed border masks, one plane per 3x3 tap
    # w1_ref  : (4*C2, 9*C2)         sub-pixel ConvTranspose2d weights, BN1 scale folded
    # w2_ref  : (3, 4*Cout, 12*C2)   phase-plane Conv2d weights, BN2 scale folded
    # b1_ref  : (4*C2, 1)            folded BN1 shift (incl. conv-transpose bias)
    # b2_ref  : (4*Cout, 1)          folded BN2 shift (incl. conv bias)
    # o_ref   : (1, 4*Cout, HWb)     output phase planes, pixels in lanes
    z = z_ref[0]                                       # (C2, HWb) f32
    masks = mask_ref[...]                              # (9, HWb)  f32, loaded once
    HWb = z.shape[-1]

    def tap(src, dh, dw):
        # src sampled at spatial offset (dh-1, dw-1) with zero padding.  The
        # precomputed mask plane zeroes both the intra-image roll wrap and the
        # junction between lane-batched images.
        s = (dh - 1) * W + (dw - 1)
        rolled = src if s == 0 else pltpu.roll(src, (-s) % HWb, 1)
        if dh == 1 and dw == 1:
            return rolled
        k = dh * 3 + dw
        return rolled * masks[k:k + 1, :]

    # ---- ConvTranspose2d(k=4, s=2, p=1): sub-pixel decomposition ------------
    # One fused matmul: (4 phases * C2, 9 taps * C2) @ (9 taps * C2, HWb).
    p1 = jnp.concatenate([tap(z, dh, dw) for dh in range(3) for dw in range(3)],
                         axis=0)                                     # (9*C2, HWb)
    t = jnp.dot(w1_ref[...], p1, preferred_element_type=jnp.float32)
    t = t + b1_ref[...]                                 # fused BN1 shift (scale in w1)

    # ---- Conv2d(k=3, s=1, p=1) on the phase planes --------------------------
    # Three fused matmuls (one per row tap), K = 3 * 4*C2 each; accumulator is
    # initialized from the first matmul (no zero fill).
    def row_taps(ah):
        return jnp.concatenate([tap(t, ah, aw) for aw in range(3)], axis=0)  # (12*C2, HWb)

    acc = jnp.dot(w2_ref[0], row_taps(0), preferred_element_type=jnp.float32)
    acc = acc + jnp.dot(w2_ref[1], row_taps(1), preferred_element_type=jnp.float32)
    acc = acc + jnp.dot(w2_ref[2], row_taps(2), preferred_element_type=jnp.float32)

    # TODO(synk): Dropout2d is identity in eval mode; training-mode channel
    # dropout and batch-statistics BatchNorm are not implemented.
    o_ref[0] = (acc + b2_ref[...]).astype(o_ref.dtype)  # lane-dense store


# --------------------------------------------------------------------------- #
# One-time parameter preparation (host-side numpy, NOT in the per-call path)
# --------------------------------------------------------------------------- #
def _tensorcores_per_chip() -> int:
    """Best-effort TensorCore-per-chip query; correctness never depends on it."""
    try:
        info = pltpu.get_tpu_info()
        for name in ("num_tensorcores", "tensorcores_per_chip", "num_cores",
                     "cores_per_chip"):
            v = getattr(info, name, None)
            if isinstance(v, int) and v > 0:
                return v
    except Exception:
        pass
    try:
        kind = jax.devices()[0].device_kind.lower()
        if "v7" in kind or "7x" in kind:
            return 2          # v7x: 2 TensorCores per chip
    except Exception:
        pass
    return 1                  # v5e / v6e: single TensorCore


def prepare_decoder_params(params, *, batch, height, width, eps=1e-5,
                           tensorcores=None):
    """Fold biases + eval-mode BN into matmul weights/shifts; build border masks.

    Returns a dict of device arrays to pass to `decoder_block_forward`.
    Runs once (numpy) when parameters are loaded -- nothing here is re-executed
    in the forward path.
    """
    (w_ct, b_ct, w_c, b_c, g1, be1, m1, v1, g2, be2, m2, v2) = [
        np.asarray(p, np.float32) for p in params]
    C2 = w_ct.shape[0]
    Cout = w_c.shape[0]
    H, W = height, width
    HW = H * W

    # BN folding: scale goes into the weights, shift stays as a per-channel add.
    s1 = g1 / np.sqrt(v1 + eps)
    sh1 = (b_ct - m1) * s1 + be1
    s2 = g2 / np.sqrt(v2 + eps)
    sh2 = (b_c - m2) * s2 + be2

    # ---- sub-pixel weights for ConvTranspose2d(k=4, s=2, p=1) ---------------
    # output phase (ph, pw) at pixel (r, c):
    #   out[2r+ph, 2c+pw, oc] = sum_{dh in {ph,ph+1}, dw in {pw,pw+1}, ic}
    #       zpad[r+dh, c+dw, ic] * W_ct[ic, oc, 3+ph-2dh, 3+pw-2dw]
    w1 = np.zeros((4, C2, 9, C2), np.float32)      # [(ph,pw), oc, (dh,dw), ic]
    for ph in range(2):
        for pw in range(2):
            for dh in (ph, ph + 1):
                for dw in (pw, pw + 1):
                    kh = 3 + ph - 2 * dh
                    kw = 3 + pw - 2 * dw
                    w1[ph * 2 + pw, :, dh * 3 + dw, :] = w_ct[:, :, kh, kw].T
    w1 *= s1[None, :, None, None]                  # BN1 scale folded per t-channel
    w1 = w1.reshape(4 * C2, 9 * C2)
    b1 = np.tile(sh1, 4).reshape(4 * C2, 1)

    # ---- phase-plane weights for Conv2d(k=3, s=1, p=1) ----------------------
    # The 3x3 conv over the interleaved t is a 3x3 conv over the t phase planes
    # with remapped channel blocks: tap (dh, dw) at output phase (ph', pw')
    # reads t phase (qh, qw) at phase-grid tap (ah, aw).
    w2 = np.zeros((3, 4, Cout, 3, 4, C2), np.float32)  # [ah,(ph'pw'),oc,aw,(qh qw),ic]
    for php in range(2):
        for pwp in range(2):
            for dh in range(3):
                for dw in range(3):
                    eh = php - 1 + dh
                    ew = pwp - 1 + dw
                    qh, ah = eh % 2, eh // 2 + 1
                    qw, aw = ew % 2, ew // 2 + 1
                    w2[ah, php * 2 + pwp, :, aw, qh * 2 + qw, :] = w_c[:, :, dh, dw]
    w2 *= s2[None, None, :, None, None, None]      # BN2 scale folded per out-channel
    w2 = w2.reshape(3, 4 * Cout, 12 * C2)
    b2 = np.tile(sh2, 4).reshape(4 * Cout, 1)

    # ---- batching strategy (chip-conditional) --------------------------------
    # Dual-TensorCore chips (v7x): keep grid=(N,) "parallel".  Single-TC chips
    # (v5e/v6e): stack the images along lanes and collapse the grid to (1,).
    tc = _tensorcores_per_chip() if tensorcores is None else int(tensorcores)
    groups = tc if (tc > 1 and batch % tc == 0) else 1
    imgs_per_group = batch // groups

    # ---- border masks, one (1, HW) plane per 3x3 tap, tiled per image --------
    pix = np.arange(HW)
    row = pix // W
    col = pix % W
    masks = np.ones((9, HW), np.float32)
    for dh in range(3):
        for dw in range(3):
            m = np.ones(HW, bool)
            if dh == 0:
                m &= row >= 1
            if dh == 2:
                m &= row < H - 1
            if dw == 0:
                m &= col >= 1
            if dw == 2:
                m &= col < W - 1
            masks[dh * 3 + dw] = m.astype(np.float32)
    masks = np.tile(masks, (1, imgs_per_group))    # (9, imgs_per_group * HW)

    return {
        "w1": jnp.asarray(w1),
        "w2": jnp.asarray(w2),
        "b1": jnp.asarray(b1),
        "b2": jnp.asarray(b2),
        "mask": jnp.asarray(masks),
    }


# --------------------------------------------------------------------------- #
# Forward (jitted) -- only cheap layout ops + the pallas_call
# --------------------------------------------------------------------------- #
@jax.jit
def decoder_block_forward(x, y, prep):
    """x, y: (N, Cin, H, W) float32 (NCHW, like PyTorch). Returns (N, Cout, 2H, 2W)."""
    w1, w2, b1, b2, mask = prep["w1"], prep["w2"], prep["b1"], prep["b2"], prep["mask"]
    N, Cin, H, W = x.shape
    C2 = 2 * Cin
    Cout = b2.shape[0] // 4
    HW = H * W
    HWb = mask.shape[1]               # lanes per grid step
    npg = HWb // HW                   # images per grid step
    G = N // npg                      # grid size
    f32 = jnp.float32

    # concat(x, y) along channels, flatten pixels, lane-batch npg images.
    z = jnp.concatenate([x.reshape(N, Cin, HW), y.reshape(N, Cin, HW)],
                        axis=1).astype(f32)                       # (N, C2, HW)
    z = z.reshape(G, npg, C2, HW).transpose(0, 2, 1, 3).reshape(G, C2, HWb)

    kernel = functools.partial(decoder_block_kernel, W=W)
    out_pp = pl.pallas_call(
        kernel,
        out_shape=jax.ShapeDtypeStruct((G, 4 * Cout, HWb), f32),
        grid=(G,),
        in_specs=[
            pl.BlockSpec((1, C2, HWb), lambda b: (b, 0, 0)),
            pl.BlockSpec((9, HWb), lambda b: (0, 0)),
            pl.BlockSpec((4 * C2, 9 * C2), lambda b: (0, 0)),
            pl.BlockSpec((3, 4 * Cout, 12 * C2), lambda b: (0, 0, 0)),
            pl.BlockSpec((4 * C2, 1), lambda b: (0, 0)),
            pl.BlockSpec((4 * Cout, 1), lambda b: (0, 0)),
        ],
        out_specs=pl.BlockSpec((1, 4 * Cout, HWb), lambda b: (b, 0, 0)),
        compiler_params=pltpu.CompilerParams(
            dimension_semantics=("parallel",)),
    )(z, mask, w1, w2, b1, b2)

    # depth-to-space (phase interleave) + un-lane-batch + NCHW: one fused transpose.
    # out_pp[g, (ph*2+pw)*Cout + oc, i*HW + r*W + c] == out[g*npg+i, oc, 2r+ph, 2c+pw]
    out = out_pp.reshape(G, 2, 2, Cout, npg, H, W)
    out = out.transpose(0, 4, 3, 5, 1, 6, 2).reshape(N, Cout, 2 * H, 2 * W)
    return out


# --------------------------------------------------------------------------- #
# Pure-JAX reference (eval-mode DecoderBlock)
# --------------------------------------------------------------------------- #
def reference(x, y, params, eps=1e-5):
    (w_ct, b_ct, w_c, b_c, g1, be1, m1, v1, g2, be2, m2, v2) = params
    z = jnp.concatenate([x, y], axis=1)
    # ConvTranspose2d(k=4, s=2, p=1) == lhs-dilated conv with flipped, transposed weight
    w_t = jnp.transpose(w_ct, (1, 0, 2, 3))[:, :, ::-1, ::-1]
    t = jax.lax.conv_general_dilated(
        z, w_t, window_strides=(1, 1), padding=((2, 2), (2, 2)),
        lhs_dilation=(2, 2), dimension_numbers=('NCHW', 'OIHW', 'NCHW'))
    t = t + b_ct[None, :, None, None]
    t = (t - m1[None, :, None, None]) * (g1 / jnp.sqrt(v1 + eps))[None, :, None, None] \
        + be1[None, :, None, None]
    o = jax.lax.conv_general_dilated(
        t, w_c, window_strides=(1, 1), padding=((1, 1), (1, 1)),
        dimension_numbers=('NCHW', 'OIHW', 'NCHW'))
    o = o + b_c[None, :, None, None]
    o = (o - m2[None, :, None, None]) * (g2 / jnp.sqrt(v2 + eps))[None, :, None, None] \
        + be2[None, :, None, None]
    return o


if __name__ == "__main__":
    key = jax.random.PRNGKey(0)
    N, Cin, H, W = 2, 4, 16, 16          # DecoderBlock(in_channels=4, out_channels=4)
    Cout = 4
    C2 = 2 * Cin
    ks = jax.random.split(key, 16)

    x = jax.random.normal(ks[0], (N, Cin, H, W), jnp.float32)
    y = jax.random.normal(ks[1], (N, Cin, H, W), jnp.float32)

    # deterministic synthetic parameters (shapes per module __init__)
    w_ct = 0.1 * jax.random.normal(ks[2], (C2, C2, 4, 4), jnp.float32)   # ConvTranspose2d.weight
    b_ct = 0.1 * jax.random.normal(ks[3], (C2,), jnp.float32)
    w_c = 0.1 * jax.random.normal(ks[4], (Cout, C2, 3, 3), jnp.float32)  # Conv2d.weight
    b_c = 0.1 * jax.random.normal(ks[5], (Cout,), jnp.float32)
    g1 = 1.0 + 0.1 * jax.random.normal(ks[6], (C2,), jnp.float32)        # BatchNorm2d(2*Cin)
    be1 = 0.1 * jax.random.normal(ks[7], (C2,), jnp.float32)
    m1 = 0.1 * jax.random.normal(ks[8], (C2,), jnp.float32)
    v1 = jax.random.uniform(ks[9], (C2,), jnp.float32, 0.5, 1.5)
    g2 = 1.0 + 0.1 * jax.random.normal(ks[10], (Cout,), jnp.float32)     # BatchNorm2d(Cout)
    be2 = 0.1 * jax.random.normal(ks[11], (Cout,), jnp.float32)
    m2 = 0.1 * jax.random.normal(ks[12], (Cout,), jnp.float32)
    v2 = jax.random.uniform(ks[13], (Cout,), jnp.float32, 0.5, 1.5)
    params = (w_ct, b_ct, w_c, b_c, g1, be1, m1, v1, g2, be2, m2, v2)

    # one-time prep (outside the jitted forward path)
    prep = prepare_decoder_params(params, batch=N, height=H, width=W)

    out = jax.block_until_ready(decoder_block_forward(x, y, prep))
    ref = jax.block_until_ready(reference(x, y, params))

    assert out.shape == (N, Cout, 2 * H, 2 * W), out.shape
    np.testing.assert_allclose(np.asarray(out), np.asarray(ref), atol=1e-3, rtol=1e-3)
    print("KERNEL_OK")
</pallas_src>

<mosaic_0001>
module attributes {stable_mosaic.version = 11 : i64} {
  func.func @decoder_block_kernel(%arg0: i32, %arg1: memref<1x8x512xf32, #tpu.memory_space<vmem>>, %arg2: memref<9x512xf32, #tpu.memory_space<vmem>>, %arg3: memref<32x72xf32, #tpu.memory_space<vmem>>, %arg4: memref<3x16x96xf32, #tpu.memory_space<vmem>>, %arg5: memref<32x1xf32, #tpu.memory_space<vmem>>, %arg6: memref<16x1xf32, #tpu.memory_space<vmem>>, %arg7: memref<1x16x512xf32, #tpu.memory_space<vmem>>) attributes {dimension_semantics = [#tpu.dimension_semantics<parallel>], iteration_bounds = array<i64: 1>, scalar_prefetch = 0 : i64, scratch_operands = 0 : i64, tpu.core_type = #tpu.core_type<tc>, window_params = [{transform_indices = @transform_0, window_bounds = array<i64: 1, 8, 512>}, {pipeline_mode = #tpu.pipeline_mode<synchronous>, transform_indices = @transform_1, window_bounds = array<i64: 9, 512>}, {pipeline_mode = #tpu.pipeline_mode<synchronous>, transform_indices = @transform_2, window_bounds = array<i64: 32, 72>}, {pipeline_mode = #tpu.pipeline_mode<synchronous>, transform_indices = @transform_3, window_bounds = array<i64: 3, 16, 96>}, {pipeline_mode = #tpu.pipeline_mode<synchronous>, transform_indices = @transform_4, window_bounds = array<i64: 32, 1>}, {pipeline_mode = #tpu.pipeline_mode<synchronous>, transform_indices = @transform_5, window_bounds = array<i64: 16, 1>}, {transform_indices = @transform_6, window_bounds = array<i64: 1, 16, 512>}]} {
    %c0 = arith.constant 0 : index
    %c0_0 = arith.constant 0 : index
    %c0_1 = arith.constant 0 : index
    %0 = vector.load %arg1[%c0, %c0_0, %c0_1] : memref<1x8x512xf32, #tpu.memory_space<vmem>>, vector<1x8x512xf32>
    %1 = vector.shape_cast %0 : vector<1x8x512xf32> to vector<8x512xf32>
    %c0_2 = arith.constant 0 : index
    %c0_3 = arith.constant 0 : index
    %2 = vector.load %arg2[%c0_2, %c0_3] : memref<9x512xf32, #tpu.memory_space<vmem>>, vector<9x512xf32>
    %c17_i32 = arith.constant 17 : i32
    %3 = tpu.dynamic_rotate %1 by %c17_i32 dim 1 : vector<8x512xf32>, i32 -> vector<8x512xf32>
    %4 = vector.extract_strided_slice %2 {offsets = [0, 0], sizes = [1, 512], strides = [1, 1]} : vector<9x512xf32> to vector<1x512xf32>
    %5 = vector.broadcast %4 : vector<1x512xf32> to vector<8x512xf32>
    %6 = arith.mulf %3, %5 : vector<8x512xf32>
    %c16_i32 = arith.constant 16 : i32
    %7 = tpu.dynamic_rotate %1 by %c16_i32 dim 1 : vector<8x512xf32>, i32 -> vector<8x512xf32>
    %8 = vector.extract_strided_slice %2 {offsets = [1, 0], sizes = [1, 512], strides = [1, 1]} : vector<9x512xf32> to vector<1x512xf32>
    %9 = vector.broadcast %8 : vector<1x512xf32> to vector<8x512xf32>
    %10 = arith.mulf %7, %9 : vector<8x512xf32>
    %c15_i32 = arith.constant 15 : i32
    %11 = tpu.dynamic_rotate %1 by %c15_i32 dim 1 : vector<8x512xf32>, i32 -> vector<8x512xf32>
    %12 = vector.extract_strided_slice %2 {offsets = [2, 0], sizes = [1, 512], strides = [1, 1]} : vector<9x512xf32> to vector<1x512xf32>
    %13 = vector.broadcast %12 : vector<1x512xf32> to vector<8x512xf32>
    %14 = arith.mulf %11, %13 : vector<8x512xf32>
    %c1_i32 = arith.constant 1 : i32
    %15 = tpu.dynamic_rotate %1 by %c1_i32 dim 1 : vector<8x512xf32>, i32 -> vector<8x512xf32>
    %16 = vector.extract_strided_slice %2 {offsets = [3, 0], sizes = [1, 512], strides = [1, 1]} : vector<9x512xf32> to vector<1x512xf32>
    %17 = vector.broadcast %16 : vector<1x512xf32> to vector<8x512xf32>
    %18 = arith.mulf %15, %17 : vector<8x512xf32>
    %c511_i32 = arith.constant 511 : i32
    %19 = tpu.dynamic_rotate %1 by %c511_i32 dim 1 : vector<8x512xf32>, i32 -> vector<8x512xf32>
    %20 = vector.extract_strided_slice %2 {offsets = [5, 0], sizes = [1, 512], strides = [1, 1]} : vector<9x512xf32> to vector<1x512xf32>
    %21 = vector.broadcast %20 : vector<1x512xf32> to vector<8x512xf32>
    %22 = arith.mulf %19, %21 : vector<8x512xf32>
    %c497_i32 = arith.constant 497 : i32
    %23 = tpu.dynamic_rotate %1 by %c497_i32 dim 1 : vector<8x512xf32>, i32 -> vector<8x512xf32>
    %24 = vector.extract_strided_slice %2 {offsets = [6, 0], sizes = [1, 512], strides = [1, 1]} : vector<9x512xf32> to vector<1x512xf32>
    %25 = vector.broadcast %24 : vector<1x512xf32> to vector<8x512xf32>
    %26 = arith.mulf %23, %25 : vector<8x512xf32>
    %c496_i32 = arith.constant 496 : i32
    %27 = tpu.dynamic_rotate %1 by %c496_i32 dim 1 : vector<8x512xf32>, i32 -> vector<8x512xf32>
    %28 = vector.extract_strided_slice %2 {offsets = [7, 0], sizes = [1, 512], strides = [1, 1]} : vector<9x512xf32> to vector<1x512xf32>
    %29 = vector.broadcast %28 : vector<1x512xf32> to vector<8x512xf32>
    %30 = arith.mulf %27, %29 : vector<8x512xf32>
    %c495_i32 = arith.constant 495 : i32
    %31 = tpu.dynamic_rotate %1 by %c495_i32 dim 1 : vector<8x512xf32>, i32 -> vector<8x512xf32>
    %32 = vector.extract_strided_slice %2 {offsets = [8, 0], sizes = [1, 512], strides = [1, 1]} : vector<9x512xf32> to vector<1x512xf32>
    %33 = vector.broadcast %32 : vector<1x512xf32> to vector<8x512xf32>
    %34 = arith.mulf %31, %33 : vector<8x512xf32>
    %35 = tpu.concatenate %6, %10, %14, %18, %1, %22, %26, %30, %34 in 0 : vector<8x512xf32>, vector<8x512xf32>, vector<8x512xf32>, vector<8x512xf32>, vector<8x512xf32>, vector<8x512xf32>, vector<8x512xf32>, vector<8x512xf32>, vector<8x512xf32> -> vector<72x512xf32>
    %c0_4 = arith.constant 0 : index
    %c0_5 = arith.constant 0 : index
    %36 = vector.load %arg3[%c0_4, %c0_5] : memref<32x72xf32, #tpu.memory_space<vmem>>, vector<32x72xf32>
    %cst = arith.constant dense<0.000000e+00> : vector<32x512xf32>
    %37 = tpu.matmul %36, %35, %cst {dimension_numbers = #tpu.dot_dimension_numbers<[1], [0], [0], [1], [0, 0, 1, 1], [], []>} : vector<32x72xf32>, vector<72x512xf32>, vector<32x512xf32> -> vector<32x512xf32>
    %c0_6 = arith.constant 0 : index
    %c0_7 = arith.constant 0 : index
    %38 = vector.load %arg5[%c0_6, %c0_7] : memref<32x1xf32, #tpu.memory_space<vmem>>, vector<32x1xf32>
    %39 = vector.broadcast %38 : vector<32x1xf32> to vector<32x512xf32>
    %40 = arith.addf %37, %39 : vector<32x512xf32>
    %c0_8 = arith.constant 0 : index
    %c0_9 = arith.constant 0 : index
    %c0_10 = arith.constant 0 : index
    %41 = vector.load %arg4[%c0_8, %c0_9, %c0_10] : memref<3x16x96xf32, #tpu.memory_space<vmem>>, vector<1x16x96xf32>
    %42 = vector.shape_cast %41 : vector<1x16x96xf32> to vector<16x96xf32>
    %c17_i32_11 = arith.constant 17 : i32
    %43 = tpu.dynamic_rotate %40 by %c17_i32_11 dim 1 : vector<32x512xf32>, i32 -> vector<32x512xf32>
    %44 = vector.extract_strided_slice %2 {offsets = [0, 0], sizes = [1, 512], strides = [1, 1]} : vector<9x512xf32> to vector<1x512xf32>
    %45 = vector.broadcast %44 : vector<1x512xf32> to vector<32x512xf32>
    %46 = arith.mulf %43, %45 : vector<32x512xf32>
    %c16_i32_12 = arith.constant 16 : i32
    %47 = tpu.dynamic_rotate %40 by %c16_i32_12 dim 1 : vector<32x512xf32>, i32 -> vector<32x512xf32>
    %48 = vector.extract_strided_slice %2 {offsets = [1, 0], sizes = [1, 512], strides = [1, 1]} : vector<9x512xf32> to vector<1x512xf32>
    %49 = vector.broadcast %48 : vector<1x512xf32> to vector<32x512xf32>
    %50 = arith.mulf %47, %49 : vector<32x512xf32>
    %c15_i32_13 = arith.constant 15 : i32
    %51 = tpu.dynamic_rotate %40 by %c15_i32_13 dim 1 : vector<32x512xf32>, i32 -> vector<32x512xf32>
    %52 = vector.extract_strided_slice %2 {offsets = [2, 0], sizes = [1, 512], strides = [1, 1]} : vector<9x512xf32> to vector<1x512xf32>
    %53 = vector.broadcast %52 : vector<1x512xf32> to vector<32x512xf32>
    %54 = arith.mulf %51, %53 : vector<32x512xf32>
    %55 = tpu.concatenate %46, %50, %54 in 0 : vector<32x512xf32>, vector<32x512xf32>, vector<32x512xf32> -> vector<96x512xf32>
    %cst_14 = arith.constant dense<0.000000e+00> : vector<16x512xf32>
    %56 = tpu.matmul %42, %55, %cst_14 {dimension_numbers = #tpu.dot_dimension_numbers<[1], [0], [0], [1], [0, 0, 1, 1], [], []>} : vector<16x96xf32>, vector<96x512xf32>, vector<16x512xf32> -> vector<16x512xf32>
    %c1 = arith.constant 1 : index
    %c0_15 = arith.constant 0 : index
    %c0_16 = arith.constant 0 : index
    %57 = vector.load %arg4[%c1, %c0_15, %c0_16] : memref<3x16x96xf32, #tpu.memory_space<vmem>>, vector<1x16x96xf32>
    %58 = vector.shape_cast %57 : vector<1x16x96xf32> to vector<16x96xf32>
    %c1_i32_17 = arith.constant 1 : i32
    %59 = tpu.dynamic_rotate %40 by %c1_i32_17 dim 1 : vector<32x512xf32>, i32 -> vector<32x512xf32>
    %60 = vector.extract_strided_slice %2 {offsets = [3, 0], sizes = [1, 512], strides = [1, 1]} : vector<9x512xf32> to vector<1x512xf32>
    %61 = vector.broadcast %60 : vector<1x512xf32> to vector<32x512xf32>
    %62 = arith.mulf %59, %61 : vector<32x512xf32>
    %c511_i32_18 = arith.constant 511 : i32
    %63 = tpu.dynamic_rotate %40 by %c511_i32_18 dim 1 : vector<32x512xf32>, i32 -> vector<32x512xf32>
    %64 = vector.extract_strided_slice %2 {offsets = [5, 0], sizes = [1, 512], strides = [1, 1]} : vector<9x512xf32> to vector<1x512xf32>
    %65 = vector.broadcast %64 : vector<1x512xf32> to vector<32x512xf32>
    %66 = arith.mulf %63, %65 : vector<32x512xf32>
    %67 = tpu.concatenate %62, %40, %66 in 0 : vector<32x512xf32>, vector<32x512xf32>, vector<32x512xf32> -> vector<96x512xf32>
    %cst_19 = arith.constant dense<0.000000e+00> : vector<16x512xf32>
    %68 = tpu.matmul %58, %67, %cst_19 {dimension_numbers = #tpu.dot_dimension_numbers<[1], [0], [0], [1], [0, 0, 1, 1], [], []>} : vector<16x96xf32>, vector<96x512xf32>, vector<16x512xf32> -> vector<16x512xf32>
    %69 = arith.addf %56, %68 : vector<16x512xf32>
    %c2 = arith.constant 2 : index
    %c0_20 = arith.constant 0 : index
    %c0_21 = arith.constant 0 : index
    %70 = vector.load %arg4[%c2, %c0_20, %c0_21] : memref<3x16x96xf32, #tpu.memory_space<vmem>>, vector<1x16x96xf32>
    %71 = vector.shape_cast %70 : vector<1x16x96xf32> to vector<16x96xf32>
    %c497_i32_22 = arith.constant 497 : i32
    %72 = tpu.dynamic_rotate %40 by %c497_i32_22 dim 1 : vector<32x512xf32>, i32 -> vector<32x512xf32>
    %73 = vector.extract_strided_slice %2 {offsets = [6, 0], sizes = [1, 512], strides = [1, 1]} : vector<9x512xf32> to vector<1x512xf32>
    %74 = vector.broadcast %73 : vector<1x512xf32> to vector<32x512xf32>
    %75 = arith.mulf %72, %74 : vector<32x512xf32>
    %c496_i32_23 = arith.constant 496 : i32
    %76 = tpu.dynamic_rotate %40 by %c496_i32_23 dim 1 : vector<32x512xf32>, i32 -> vector<32x512xf32>
    %77 = vector.extract_strided_slice %2 {offsets = [7, 0], sizes = [1, 512], strides = [1, 1]} : vector<9x512xf32> to vector<1x512xf32>
    %78 = vector.broadcast %77 : vector<1x512xf32> to vector<32x512xf32>
    %79 = arith.mulf %76, %78 : vector<32x512xf32>
    %c495_i32_24 = arith.constant 495 : i32
    %80 = tpu.dynamic_rotate %40 by %c495_i32_24 dim 1 : vector<32x512xf32>, i32 -> vector<32x512xf32>
    %81 = vector.extract_strided_slice %2 {offsets = [8, 0], sizes = [1, 512], strides = [1, 1]} : vector<9x512xf32> to vector<1x512xf32>
    %82 = vector.broadcast %81 : vector<1x512xf32> to vector<32x512xf32>
    %83 = arith.mulf %80, %82 : vector<32x512xf32>
    %84 = tpu.concatenate %75, %79, %83 in 0 : vector<32x512xf32>, vector<32x512xf32>, vector<32x512xf32> -> vector<96x512xf32>
    %cst_25 = arith.constant dense<0.000000e+00> : vector<16x512xf32>
    %85 = tpu.matmul %71, %84, %cst_25 {dimension_numbers = #tpu.dot_dimension_numbers<[1], [0], [0], [1], [0, 0, 1, 1], [], []>} : vector<16x96xf32>, vector<96x512xf32>, vector<16x512xf32> -> vector<16x512xf32>
    %86 = arith.addf %69, %85 : vector<16x512xf32>
    %c0_26 = arith.constant 0 : index
    %c0_27 = arith.constant 0 : index
    %87 = vector.load %arg6[%c0_26, %c0_27] : memref<16x1xf32, #tpu.memory_space<vmem>>, vector<16x1xf32>
    %88 = vector.broadcast %87 : vector<16x1xf32> to vector<16x512xf32>
    %89 = arith.addf %86, %88 : vector<16x512xf32>
    %c0_28 = arith.constant 0 : index
    %c0_29 = arith.constant 0 : index
    %c0_30 = arith.constant 0 : index
    %90 = vector.load %arg7[%c0_28, %c0_29, %c0_30] : memref<1x16x512xf32, #tpu.memory_space<vmem>>, vector<1x16x512xf32>
    %91 = vector.shape_cast %90 : vector<1x16x512xf32> to vector<16x512xf32>
    %92 = vector.shape_cast %89 : vector<16x512xf32> to vector<1x16x512xf32>
    tpu.vector_store %arg7[%c0_28, %c0_29, %c0_30], %92 {strides = array<i32>} : memref<1x16x512xf32, #tpu.memory_space<vmem>>, vector<1x16x512xf32>,
    return
  }
  func.func @transform_0(%arg0: i32) -> (i32, i32, i32) {
    %c0_i32 = arith.constant 0 : i32
    %c0_i32_0 = arith.constant 0 : i32
    %c0_i32_1 = arith.constant 0 : i32
    return %arg0, %c0_i32, %c0_i32_0 : i32, i32, i32
  }
  func.func @transform_1(%arg0: i32) -> (i32, i32) {
    %c0_i32 = arith.constant 0 : i32
    %c0_i32_0 = arith.constant 0 : i32
    %c0_i32_1 = arith.constant 0 : i32
    return %c0_i32, %c0_i32_0 : i32, i32
  }
  func.func @transform_2(%arg0: i32) -> (i32, i32) {
    %c0_i32 = arith.constant 0 : i32
    %c0_i32_0 = arith.constant 0 : i32
    %c0_i32_1 = arith.constant 0 : i32
    return %c0_i32, %c0_i32_0 : i32, i32
  }
  func.func @transform_3(%arg0: i32) -> (i32, i32, i32) {
    %c0_i32 = arith.constant 0 : i32
    %c0_i32_0 = arith.constant 0 : i32
    %c0_i32_1 = arith.constant 0 : i32
    %c0_i32_2 = arith.constant 0 : i32
    return %c0_i32, %c0_i32_0, %c0_i32_1 : i32, i32, i32
  }
  func.func @transform_4(%arg0: i32) -> (i32, i32) {
    %c0_i32 = arith.constant 0 : i32
    %c0_i32_0 = arith.constant 0 : i32
    %c0_i32_1 = arith.constant 0 : i32
    return %c0_i32, %c0_i32_0 : i32, i32
  }
  func.func @transform_5(%arg0: i32) -> (i32, i32) {
    %c0_i32 = arith.constant 0 : i32
    %c0_i32_0 = arith.constant 0 : i32
    %c0_i32_1 = arith.constant 0 : i32
    return %c0_i32, %c0_i32_0 : i32, i32
  }
  func.func @transform_6(%arg0: i32) -> (i32, i32, i32) {
    %c0_i32 = arith.constant 0 : i32
    %c0_i32_0 = arith.constant 0 : i32
    %c0_i32_1 = arith.constant 0 : i32
    return %arg0, %c0_i32, %c0_i32_0 : i32, i32, i32
  }
}

</mosaic_0001>

<llo_original>
// kernel: decoder_block_forward.1
$region0: #{decoder_block_forward.1}
  #allocation0 [shape = 'u32[]', space=smem, size = 0x4, offset = 0x4, fixed_abs, tag = 'smem constant byte address 0x4 - core index']
  #allocation1 [shape = 'u32[144,128]{1,0:T(1,128)}', space=vmem, size = 0x12000, scoped, tag = 'internal scratch']
  %s0 = inlined_call_operand.vmem [shape: f32[1,8,512], index: 0, kind: input, shape index: {}]
  %s1 = inlined_call_operand.vmem [shape: f32[9,512], index: 1, kind: input, shape index: {}]
  %s2 = inlined_call_operand.vmem [shape: f32[32,72], index: 2, kind: input, shape index: {}]
  %s3 = inlined_call_operand.vmem [shape: f32[3,16,96], index: 3, kind: input, shape index: {}]
  %s4 = inlined_call_operand.vmem [shape: f32[32,1], index: 4, kind: input, shape index: {}]
  %s5 = inlined_call_operand.vmem [shape: f32[16,1], index: 5, kind: input, shape index: {}]
  %s6 = inlined_call_operand.vmem [shape: f32[1,16,512], index: 6, kind: output, shape index: {}]
  %s7 = sld [smem:[#allocation0]]
  $region34: #{decoder_block_forward.1} parent=0
    _
  %s9 = ssub.s32 1, %s7
  %s10 = scalar_select 0, %s9, %s7
  // Predicated region
  $region2: #{decoder_block_forward.1} parent=0 // pred_check
    _
  $region3: #{decoder_block_forward.1} parent=0 // pred_check_branch
    %12 = sbr.rel (0) target = $region5
  $region4: #{decoder_block_forward.1} parent=0 // pred_region
    _
  $region5: #{decoder_block_forward.1} parent=0 // pred_fallthru
    _
  // Predicated region
  $region6: #{decoder_block_forward.1} parent=0 // pred_check
    _
  $region7: #{decoder_block_forward.1} parent=0 // pred_check_branch
    %14 = sbr.rel (0) target = $region9
  $region8: #{decoder_block_forward.1} parent=0 // pred_region
    _
  $region9: #{decoder_block_forward.1} parent=0 // pred_fallthru
    _
  // Predicated region
  $region10: #{decoder_block_forward.1} parent=0 // pred_check
    _
  $region11: #{decoder_block_forward.1} parent=0 // pred_check_branch
    %16 = sbr.rel (0) target = $region13
  $region12: #{decoder_block_forward.1} parent=0 // pred_region
    _
  $region13: #{decoder_block_forward.1} parent=0 // pred_fallthru
    _
  // Predicated region
  $region14: #{decoder_block_forward.1} parent=0 // pred_check
    _
  $region15: #{decoder_block_forward.1} parent=0 // pred_check_branch
    %18 = sbr.rel (0) target = $region17
  $region16: #{decoder_block_forward.1} parent=0 // pred_region
    _
  $region17: #{decoder_block_forward.1} parent=0 // pred_fallthru
    _
  // Predicated region
  $region18: #{decoder_block_forward.1} parent=0 // pred_check
    _
  $region19: #{decoder_block_forward.1} parent=0 // pred_check_branch
    %20 = sbr.rel (0) target = $region21
  $region20: #{decoder_block_forward.1} parent=0 // pred_region
    _
  $region21: #{decoder_block_forward.1} parent=0 // pred_fallthru
    _
  // Predicated region
  $region22: #{decoder_block_forward.1} parent=0 // pred_check
    _
  $region23: #{decoder_block_forward.1} parent=0 // pred_check_branch
    %22 = sbr.rel (0) target = $region25
  $region24: #{decoder_block_forward.1} parent=0 // pred_region
    _
  $region25: #{decoder_block_forward.1} parent=0 // pred_fallthru
    _
  %v23 = vld [vmem:[%s0] sm:$0xff]
  %v24 = vld [vmem:[%s0 + $0x8] sm:$0xff]
  %v25 = vld [vmem:[%s0 + $0x10] sm:$0xff]
  %v26 = vld [vmem:[%s0 + $0x18] sm:$0xff]
  %v27 = vld [vmem:[%s1] sm:$0xff]
  %v28 = vld [vmem:[%s1 + $0x8] sm:$0xff]
  %v29 = vld [vmem:[%s1 + $0x10] sm:$0xff]
  %v30 = vld [vmem:[%s1 + $0x18] sm:$0xff]
  %v31 = vld [vmem:[%s1 + $0x20] sm:$0x1]
  %v32 = vld [vmem:[%s1 + $0x28] sm:$0x1]
  %v33 = vld [vmem:[%s1 + $0x30] sm:$0x1]
  %v34 = vld [vmem:[%s1 + $0x38] sm:$0x1]
  %35 = vrot.lane.b32.xlu0 %v23, 17
  %v36 = vpop.permute.xlu0 %35
  %37 = vrot.lane.b32.xlu0 %v24, 17
  %v38 = vpop.permute.xlu0 %37
  %39 = vrot.lane.b32.xlu0 %v25, 17
  %v40 = vpop.permute.xlu0 %39
  %41 = vrot.lane.b32.xlu0 %v26, 17
  %v42 = vpop.permute.xlu0 %41
  %v43 = vlaneseq
  %v44 = vand.u32 %v43, 127
  %vm45 = vcmp.lt.s32.totalorder %v44, 17
  %v46 = vsel %vm45, %v40, %v42
  %v47 = vsel %vm45, %v38, %v40
  %v48 = vsel %vm45, %v36, %v38
  %v49 = vsel %vm45, %v42, %v36
  %v50 = vlaneseq
  %v51 = vshrl.u32 %v50, 7
  %v52 = vsub.s32 0, %v51
  %v53 = vrot.slane %v27, %v52
  %v54 = vlaneseq
  %v55 = vshrl.u32 %v54, 7
  %v56 = vsub.s32 0, %v55
  %v57 = vrot.slane %v28, %v56
  %v58 = vlaneseq
  %v59 = vshrl.u32 %v58, 7
  %v60 = vsub.s32 0, %v59
  %v61 = vrot.slane %v29, %v60
  %v62 = vlaneseq
  %v63 = vshrl.u32 %v62, 7
  %v64 = vsub.s32 0, %v63
  %v65 = vrot.slane %v30, %v64
  %v66 = vmul.f32 %v49, %v53
  %v67 = vmul.f32 %v48, %v57
  %v68 = vmul.f32 %v47, %v61
  %v69 = vmul.f32 %v46, %v65
  %70 = vrot.lane.b32.xlu0 %v23, 16
  %v71 = vpop.permute.xlu0 %70
  %72 = vrot.lane.b32.xlu0 %v24, 16
  %v73 = vpop.permute.xlu0 %72
  %74 = vrot.lane.b32.xlu0 %v25, 16
  %v75 = vpop.permute.xlu0 %74
  %76 = vrot.lane.b32.xlu0 %v26, 16
  %v77 = vpop.permute.xlu0 %76
  %vm78 = vcmp.lt.s32.totalorder %v44, 16
  %v79 = vsel %vm78, %v75, %v77
  %v80 = vsel %vm78, %v73, %v75
  %v81 = vsel %vm78, %v71, %v73
  %v82 = vsel %vm78, %v77, %v71
  %v83 = vlaneseq
  %v84 = vshrl.u32 %v83, 7
  %v85 = vsub.s32 1, %v84
  %v86 = vrot.slane %v27, %v85
  %v87 = vlaneseq
  %v88 = vshrl.u32 %v87, 7
  %v89 = vsub.s32 1, %v88
  %v90 = vrot.slane %v28, %v89
  %v91 = vlaneseq
  %v92 = vshrl.u32 %v91, 7
  %v93 = vsub.s32 1, %v92
  %v94 = vrot.slane %v29, %v93
  %v95 = vlaneseq
  %v96 = vshrl.u32 %v95, 7
  %v97 = vsub.s32 1, %v96
  %v98 = vrot.slane %v30, %v97
  %v99 = vmul.f32 %v82, %v86
  %v100 = vmul.f32 %v81, %v90
  %v101 = vmul.f32 %v80, %v94
  %v102 = vmul.f32 %v79, %v98
  %103 = vrot.lane.b32.xlu0 %v23, 15
  %v104 = vpop.permute.xlu0 %103
  %105 = vrot.lane.b32.xlu0 %v24, 15
  %v106 = vpop.permute.xlu0 %105
  %107 = vrot.lane.b32.xlu0 %v25, 15
  %v108 = vpop.permute.xlu0 %107
  %109 = vrot.lane.b32.xlu0 %v26, 15
  %v110 = vpop.permute.xlu0 %109
  %vm111 = vcmp.lt.s32.totalorder %v44, 15
  %v112 = vsel %vm111, %v108, %v110
  %v113 = vsel %vm111, %v106, %v108
  %v114 = vsel %vm111, %v104, %v106
  %v115 = vsel %vm111, %v110, %v104
  %v116 = vlaneseq
  %v117 = vshrl.u32 %v116, 7
  %v118 = vsub.s32 2, %v117
  %v119 = vrot.slane %v27, %v118
  %v120 = vlaneseq
  %v121 = vshrl.u32 %v120, 7
  %v122 = vsub.s32 2, %v121
  %v123 = vrot.slane %v28, %v122
  %v124 = vlaneseq
  %v125 = vshrl.u32 %v124, 7
  %v126 = vsub.s32 2, %v125
  %v127 = vrot.slane %v29, %v126
  %v128 = vlaneseq
  %v129 = vshrl.u32 %v128, 7
  %v130 = vsub.s32 2, %v129
  %v131 = vrot.slane %v30, %v130
  %v132 = vmul.f32 %v115, %v119
  %v133 = vmul.f32 %v114, %v123
  %v134 = vmul.f32 %v113, %v127
  %v135 = vmul.f32 %v112, %v131
  %136 = vrot.lane.b32.xlu0 %v23, 1
  %v137 = vpop.permute.xlu0 %136
  %138 = vrot.lane.b32.xlu0 %v24, 1
  %v139 = vpop.permute.xlu0 %138
  %140 = vrot.lane.b32.xlu0 %v25, 1
  %v141 = vpop.permute.xlu0 %140
  %142 = vrot.lane.b32.xlu0 %v26, 1
  %v143 = vpop.permute.xlu0 %142
  %vm144 = vcmp.lt.s32.totalorder %v44, 1
  %v145 = vsel %vm144, %v141, %v143
  %v146 = vsel %vm144, %v139, %v141
  %v147 = vsel %vm144, %v137, %v139
  %v148 = vsel %vm144, %v143, %v137
  %v149 = vlaneseq
  %v150 = vshrl.u32 %v149, 7
  %v151 = vsub.s32 3, %v150
  %v152 = vrot.slane %v27, %v151
  %v153 = vlaneseq
  %v154 = vshrl.u32 %v153, 7
  %v155 = vsub.s32 3, %v154
  %v156 = vrot.slane %v28, %v155
  %v157 = vlaneseq
  %v158 = vshrl.u32 %v157, 7
  %v159 = vsub.s32 3, %v158
  %v160 = vrot.slane %v29, %v159
  %v161 = vlaneseq
  %v162 = vshrl.u32 %v161, 7
  %v163 = vsub.s32 3, %v162
  %v164 = vrot.slane %v30, %v163
  %v165 = vmul.f32 %v148, %v152
  %v166 = vmul.f32 %v147, %v156
  %v167 = vmul.f32 %v146, %v160
  %v168 = vmul.f32 %v145, %v164
  %169 = vrot.lane.b32.xlu0 %v23, 127
  %v170 = vpop.permute.xlu0 %169
  %171 = vrot.lane.b32.xlu0 %v24, 127
  %v172 = vpop.permute.xlu0 %171
  %173 = vrot.lane.b32.xlu0 %v25, 127
  %v174 = vpop.permute.xlu0 %173
  %175 = vrot.lane.b32.xlu0 %v26, 127
  %v176 = vpop.permute.xlu0 %175
  %vm177 = vcmp.lt.s32.totalorder %v44, 127
  %v178 = vsel %vm177, %v174, %v176
  %v179 = vsel %vm177, %v172, %v174
  %v180 = vsel %vm177, %v170, %v172
  %v181 = vsel %vm177, %v176, %v170
  %v182 = vlaneseq
  %v183 = vshrl.u32 %v182, 7
  %v184 = vsub.s32 5, %v183
  %v185 = vrot.slane %v27, %v184
  %v186 = vlaneseq
  %v187 = vshrl.u32 %v186, 7
  %v188 = vsub.s32 5, %v187
  %v189 = vrot.slane %v28, %v188
  %v190 = vlaneseq
  %v191 = vshrl.u32 %v190, 7
  %v192 = vsub.s32 5, %v191
  %v193 = vrot.slane %v29, %v192
  %v194 = vlaneseq
  %v195 = vshrl.u32 %v194, 7
  %v196 = vsub.s32 5, %v195
  %v197 = vrot.slane %v30, %v196
  %v198 = vmul.f32 %v180, %v185
  %v199 = vmul.f32 %v179, %v189
  %v200 = vmul.f32 %v178, %v193
  %v201 = vmul.f32 %v181, %v197
  %202 = vrot.lane.b32.xlu0 %v23, 113
  %v203 = vpop.permute.xlu0 %202
  %204 = vrot.lane.b32.xlu0 %v24, 113
  %v205 = vpop.permute.xlu0 %204
  %206 = vrot.lane.b32.xlu0 %v25, 113
  %v207 = vpop.permute.xlu0 %206
  %208 = vrot.lane.b32.xlu0 %v26, 113
  %v209 = vpop.permute.xlu0 %208
  %vm210 = vcmp.lt.s32.totalorder %v44, 113
  %v211 = vsel %vm210, %v207, %v209
  %v212 = vsel %vm210, %v205, %v207
  %v213 = vsel %vm210, %v203, %v205
  %v214 = vsel %vm210, %v209, %v203
  %v215 = vlaneseq
  %v216 = vshrl.u32 %v215, 7
  %v217 = vsub.s32 6, %v216
  %v218 = vrot.slane %v27, %v217
  %v219 = vlaneseq
  %v220 = vshrl.u32 %v219, 7
  %v221 = vsub.s32 6, %v220
  %v222 = vrot.slane %v28, %v221
  %v223 = vlaneseq
  %v224 = vshrl.u32 %v223, 7
  %v225 = vsub.s32 6, %v224
  %v226 = vrot.slane %v29, %v225
  %v227 = vlaneseq
  %v228 = vshrl.u32 %v227, 7
  %v229 = vsub.s32 6, %v228
  %v230 = vrot.slane %v30, %v229
  %v231 = vmul.f32 %v213, %v218
  %v232 = vmul.f32 %v212, %v222
  %v233 = vmul.f32 %v211, %v226
  %v234 = vmul.f32 %v214, %v230
  %235 = vrot.lane.b32.xlu0 %v23, 112
  %v236 = vpop.permute.xlu0 %235
  %237 = vrot.lane.b32.xlu0 %v24, 112
  %v238 = vpop.permute.xlu0 %237
  %239 = vrot.lane.b32.xlu0 %v25, 112
  %v240 = vpop.permute.xlu0 %239
  %241 = vrot.lane.b32.xlu0 %v26, 112
  %v242 = vpop.permute.xlu0 %241
  %vm243 = vcmp.lt.s32.totalorder %v44, 112
  %v244 = vsel %vm243, %v240, %v242
  %v245 = vsel %vm243, %v238, %v240
  %v246 = vsel %vm243, %v236, %v238
  %v247 = vsel %vm243, %v242, %v236
  %v248 = vlaneseq
  %v249 = vshrl.u32 %v248, 7
  %v250 = vsub.s32 7, %v249
  %v251 = vrot.slane %v27, %v250
  %v252 = vlaneseq
  %v253 = vshrl.u32 %v252, 7
  %v254 = vsub.s32 7, %v253
  %v255 = vrot.slane %v28, %v254
  %v256 = vlaneseq
  %v257 = vshrl.u32 %v256, 7
  %v258 = vsub.s32 7, %v257
  %v259 = vrot.slane %v29, %v258
  %v260 = vlaneseq
  %v261 = vshrl.u32 %v260, 7
  %v262 = vsub.s32 7, %v261
  %v263 = vrot.slane %v30, %v262
  %v264 = vmul.f32 %v246, %v251
  %v265 = vmul.f32 %v245, %v255
  %v266 = vmul.f32 %v244, %v259
  %v267 = vmul.f32 %v247, %v263
  %268 = vrot.lane.b32.xlu0 %v23, 111
  %v269 = vpop.permute.xlu0 %268
  %270 = vrot.lane.b32.xlu0 %v24, 111
  %v271 = vpop.permute.xlu0 %270
  %272 = vrot.lane.b32.xlu0 %v25, 111
  %v273 = vpop.permute.xlu0 %272
  %274 = vrot.lane.b32.xlu0 %v26, 111
  %v275 = vpop.permute.xlu0 %274
  %vm276 = vcmp.lt.s32.totalorder %v44, 111
  %v277 = vsel %vm276, %v273, %v275
  %v278 = vsel %vm276, %v271, %v273
  %v279 = vsel %vm276, %v269, %v271
  %v280 = vsel %vm276, %v275, %v269
  %v281 = vlaneseq
  %v282 = vshrl.u32 %v281, 7
  %v283 = vsub.s32 0, %v282
  %v284 = vrot.slane %v31, %v283
  %v285 = vlaneseq
  %v286 = vshrl.u32 %v285, 7
  %v287 = vsub.s32 0, %v286
  %v288 = vrot.slane %v32, %v287
  %v289 = vlaneseq
  %v290 = vshrl.u32 %v289, 7
  %v291 = vsub.s32 0, %v290
  %v292 = vrot.slane %v33, %v291
  %v293 = vlaneseq
  %v294 = vshrl.u32 %v293, 7
  %v295 = vsub.s32 0, %v294
  %v296 = vrot.slane %v34, %v295
  %v297 = vmul.f32 %v279, %v284
  %v298 = vmul.f32 %v278, %v288
  %v299 = vmul.f32 %v277, %v292
  %v300 = vmul.f32 %v280, %v296
  %v301 = vld [vmem:[%s2] sm:$0xff]
  %v302 = vld [vmem:[%s2 + $0x8] sm:$0xff]
  %v303 = vld [vmem:[%s2 + $0x10] sm:$0xff]
  %v304 = vld [vmem:[%s2 + $0x18] sm:$0xff]
  %v305 = vld [vmem:[%s4] sm:$0xff]
  %v306 = vld [vmem:[%s4 + $0x8] sm:$0xff]
  %v307 = vld [vmem:[%s4 + $0x10] sm:$0xff]
  %v308 = vld [vmem:[%s4 + $0x18] sm:$0xff]
  %310 = vset.pattern.permute.xlu0 0
  %311 = vperm.xlu0 %310, %v305
  %v312 = vpop.permute.xlu0 %311
  %315 = vset.pattern.permute.xlu0 0
  %316 = vperm.xlu0 %315, %v306
  %v317 = vpop.permute.xlu0 %316
  %320 = vset.pattern.permute.xlu0 0
  %321 = vperm.xlu0 %320, %v307
  %v322 = vpop.permute.xlu0 %321
  %325 = vset.pattern.permute.xlu0 0
  %326 = vperm.xlu0 %325, %v308
  %v327 = vpop.permute.xlu0 %326
  %vm329 = vcmask 588800
  %v331 = vsel %vm329, %v301, 0
  %v334 = vsel %vm329, %v302, 0
  %v337 = vsel %vm329, %v303, 0
  %v340 = vsel %vm329, %v304, 0
  %342 = vmatprep.subr.mxu0 0.0
  %343 = vmatpush1.msra.mxu0 0.0
  %344 = vmatprep.subr.mxu0 0.0
  %345 = vmatpush1.msra.mxu0 0.0
  %346 = vmatprep.subr.mxu0 0.0
  %347 = vmatpush1.msra.mxu0 0.0
  %348 = vmatprep.subr.mxu0 0.0
  %349 = vmatpush1.msra.mxu0 0.0
  %350 = vmatprep.subr.mxu0 0.0
  %351 = vmatpush1.msra.mxu0 0.0
  %352 = vmatprep.subr.mxu0 0.0
  %353 = vmatpush1.msra.mxu0 0.0
  %354 = vmatprep.subr.mxu0 0.0
  %355 = vmatpush1.msra.mxu0 0.0
  %356 = vmatprep.subr.mxu0 %v298
  %357 = vmatpush1.msra.mxu0 %v297
  %358 = vmatprep.subr.mxu0 %v265
  %359 = vmatpush1.msra.mxu0 %v264
  %360 = vmatprep.subr.mxu0 %v232
  %361 = vmatpush1.msra.mxu0 %v231
  %362 = vmatprep.subr.mxu0 %v199
  %363 = vmatpush1.msra.mxu0 %v198
  %364 = vmatprep.subr.mxu0 %v24
  %365 = vmatpush1.msra.mxu0 %v23
  %366 = vmatprep.subr.mxu0 %v166
  %367 = vmatpush1.msra.mxu0 %v165
  %368 = vmatprep.subr.mxu0 %v133
  %369 = vmatpush1.msra.mxu0 %v132
  %370 = vmatprep.subr.mxu0 %v100
  %371 = vmatpush1.msra.mxu0 %v99
  %372 = vmatprep.subr.mxu0 %v67
  %373 = vmatpush1.msra.mxu0 %v66
  %374 = vmatprep.subr.mxu0 0.0
  %375 = vmatpush2.msra.mxu0 0.0
  %376 = vmatprep.subr.mxu0 0.0
  %377 = vmatpush2.msra.mxu0 0.0
  %378 = vmatprep.subr.mxu0 0.0
  %379 = vmatpush2.msra.mxu0 0.0
  %380 = vmatprep.subr.mxu0 0.0
  %381 = vmatpush2.msra.mxu0 0.0
  %382 = vmatprep.subr.mxu0 0.0
  %383 = vmatpush2.msra.mxu0 0.0
  %384 = vmatprep.subr.mxu0 0.0
  %385 = vmatpush2.msra.mxu0 0.0
  %386 = vmatprep.subr.mxu0 0.0
  %387 = vmatpush2.msra.mxu0 0.0
  %388 = vmatprep.subr.mxu0 0.0
  %389 = vmatpush2.msra.mxu0 0.0
  %390 = vmatprep.subr.mxu0 0.0
  %391 = vmatpush2.msra.mxu0 0.0
  %392 = vmatprep.subr.mxu0 0.0
  %393 = vmatpush2.msra.mxu0 0.0
  %394 = vmatprep.subr.mxu0 0.0
  %395 = vmatpush2.msra.mxu0 0.0
  %396 = vmatprep.subr.mxu0 0.0
  %397 = vmatpush2.msra.mxu0 0.0
  %398 = vmatprep.subr.mxu0 0.0
  %399 = vmatpush2.msra.mxu0 0.0
  %400 = vmatprep.subr.mxu0 0.0
  %401 = vmatpush2.msra.mxu0 0.0
  %402 = vmatprep.subr.mxu0 0.0
  %403 = vmatpush2.msra.mxu0 0.0
  %404 = vmatprep.subr.mxu0 0.0
  %405 = vmatpush2.msra.mxu0 0.0
  %406 = vmatprep.mubr.f32.mxu0 0.0
  %407 = vmatmul.mubr.f32.gmra.mxu0 %v331
  %v408 = vpop.f32.mrf.mxu0
  %v409 = vadd.f32 %v312, %v408
  %v410 = vpop.f32.mrf.mxu0
  %v411 = vadd.f32 %v312, %v410
  %412 = vmatprep.mubr.f32.mxu0 0.0
  %413 = vmatmul.mubr.f32.gmra.mxu0 %v334
  %v414 = vpop.f32.mrf.mxu0
  %v415 = vadd.f32 %v317, %v414
  %v416 = vpop.f32.mrf.mxu0
  %v417 = vadd.f32 %v317, %v416
  %418 = vmatprep.mubr.f32.mxu0 0.0
  %419 = vmatmul.mubr.f32.gmra.mxu0 %v337
  %v420 = vpop.f32.mrf.mxu0
  %v421 = vadd.f32 %v322, %v420
  %v422 = vpop.f32.mrf.mxu0
  %v423 = vadd.f32 %v322, %v422
  %424 = vmatprep.mubr.f32.mxu0 0.0
  %425 = vmatmul.mubr.f32.gmra.mxu0 %v340
  %v426 = vpop.f32.mrf.mxu0
  %v427 = vadd.f32 %v327, %v426
  %v428 = vpop.f32.mrf.mxu0
  %v429 = vadd.f32 %v327, %v428
  %430 = vdwg.mxu0
  %431 = vmatprep.subr.mxu0 0.0
  %432 = vmatpush1.msra.mxu0 0.0
  %433 = vmatprep.subr.mxu0 0.0
  %434 = vmatpush1.msra.mxu0 0.0
  %435 = vmatprep.subr.mxu0 0.0
  %436 = vmatpush1.msra.mxu0 0.0
  %437 = vmatprep.subr.mxu0 0.0
  %438 = vmatpush1.msra.mxu0 0.0
  %439 = vmatprep.subr.mxu0 0.0
  %440 = vmatpush1.msra.mxu0 0.0
  %441 = vmatprep.subr.mxu0 0.0
  %442 = vmatpush1.msra.mxu0 0.0
  %443 = vmatprep.subr.mxu0 0.0
  %444 = vmatpush1.msra.mxu0 0.0
  %445 = vmatprep.subr.mxu0 %v300
  %446 = vmatpush1.msra.mxu0 %v299
  %447 = vmatprep.subr.mxu0 %v267
  %448 = vmatpush1.msra.mxu0 %v266
  %449 = vmatprep.subr.mxu0 %v234
  %450 = vmatpush1.msra.mxu0 %v233
  %451 = vmatprep.subr.mxu0 %v201
  %452 = vmatpush1.msra.mxu0 %v200
  %453 = vmatprep.subr.mxu0 %v26
  %454 = vmatpush1.msra.mxu0 %v25
  %455 = vmatprep.subr.mxu0 %v168
  %456 = vmatpush1.msra.mxu0 %v167
  %457 = vmatprep.subr.mxu0 %v135
  %458 = vmatpush1.msra.mxu0 %v134
  %459 = vmatprep.subr.mxu0 %v102
  %460 = vmatpush1.msra.mxu0 %v101
  %461 = vmatprep.subr.mxu0 %v69
  %462 = vmatpush1.msra.mxu0 %v68
  %463 = vmatprep.subr.mxu0 0.0
  %464 = vmatpush2.msra.mxu0 0.0
  %465 = vmatprep.subr.mxu0 0.0
  %466 = vmatpush2.msra.mxu0 0.0
  %467 = vmatprep.subr.mxu0 0.0
  %468 = vmatpush2.msra.mxu0 0.0
  %469 = vmatprep.subr.mxu0 0.0
  %470 = vmatpush2.msra.mxu0 0.0
  %471 = vmatprep.subr.mxu0 0.0
  %472 = vmatpush2.msra.mxu0 0.0
  %473 = vmatprep.subr.mxu0 0.0
  %474 = vmatpush2.msra.mxu0 0.0
  %475 = vmatprep.subr.mxu0 0.0
  %476 = vmatpush2.msra.mxu0 0.0
  %477 = vmatprep.subr.mxu0 0.0
  %478 = vmatpush2.msra.mxu0 0.0
  %479 = vmatprep.subr.mxu0 0.0
  %480 = vmatpush2.msra.mxu0 0.0
  %481 = vmatprep.subr.mxu0 0.0
  %482 = vmatpush2.msra.mxu0 0.0
  %483 = vmatprep.subr.mxu0 0.0
  %484 = vmatpush2.msra.mxu0 0.0
  %485 = vmatprep.subr.mxu0 0.0
  %486 = vmatpush2.msra.mxu0 0.0
  %487 = vmatprep.subr.mxu0 0.0
  %488 = vmatpush2.msra.mxu0 0.0
  %489 = vmatprep.subr.mxu0 0.0
  %490 = vmatpush2.msra.mxu0 0.0
  %491 = vmatprep.subr.mxu0 0.0
  %492 = vmatpush2.msra.mxu0 0.0
  %493 = vmatprep.subr.mxu0 0.0
  %494 = vmatpush2.msra.mxu0 0.0
  %495 = vmatprep.mubr.f32.mxu0 0.0
  %496 = vmatmul.mubr.f32.gmra.mxu0 %v331
  %v497 = vpop.f32.mrf.mxu0
  %v498 = vadd.f32 %v312, %v497
  %v499 = vpop.f32.mrf.mxu0
  %v500 = vadd.f32 %v312, %v499
  %501 = vmatprep.mubr.f32.mxu0 0.0
  %502 = vmatmul.mubr.f32.gmra.mxu0 %v334
  %v503 = vpop.f32.mrf.mxu0
  %v504 = vadd.f32 %v317, %v503
  %v505 = vpop.f32.mrf.mxu0
  %v506 = vadd.f32 %v317, %v505
  %507 = vmatprep.mubr.f32.mxu0 0.0
  %508 = vmatmul.mubr.f32.gmra.mxu0 %v337
  %v509 = vpop.f32.mrf.mxu0
  %v510 = vadd.f32 %v322, %v509
  %v511 = vpop.f32.mrf.mxu0
  %v512 = vadd.f32 %v322, %v511
  %513 = vmatprep.mubr.f32.mxu0 0.0
  %514 = vmatmul.mubr.f32.gmra.mxu0 %v340
  %v515 = vpop.f32.mrf.mxu0
  %v516 = vadd.f32 %v327, %v515
  %v517 = vpop.f32.mrf.mxu0
  %v518 = vadd.f32 %v327, %v517
  %519 = vdwg.mxu0
  %v520 = vld [vmem:[%s3] sm:$0xff]
  %v521 = vld [vmem:[%s3 + $0x8] sm:$0xff]
  %522 = vrot.lane.b32.xlu0 %v409, 17
  %v523 = vpop.permute.xlu0 %522
  %524 = vrot.lane.b32.xlu0 %v415, 17
  %v525 = vpop.permute.xlu0 %524
  %526 = vrot.lane.b32.xlu0 %v421, 17
  %v527 = vpop.permute.xlu0 %526
  %528 = vrot.lane.b32.xlu0 %v427, 17
  %v529 = vpop.permute.xlu0 %528
  %530 = vrot.lane.b32.xlu0 %v411, 17
  %v531 = vpop.permute.xlu0 %530
  %532 = vrot.lane.b32.xlu0 %v417, 17
  %v533 = vpop.permute.xlu0 %532
  %534 = vrot.lane.b32.xlu0 %v423, 17
  %v535 = vpop.permute.xlu0 %534
  %536 = vrot.lane.b32.xlu0 %v429, 17
  %v537 = vpop.permute.xlu0 %536
  %538 = vrot.lane.b32.xlu0 %v498, 17
  %v539 = vpop.permute.xlu0 %538
  %540 = vrot.lane.b32.xlu0 %v504, 17
  %v541 = vpop.permute.xlu0 %540
  %542 = vrot.lane.b32.xlu0 %v510, 17
  %v543 = vpop.permute.xlu0 %542
  %544 = vrot.lane.b32.xlu0 %v516, 17
  %v545 = vpop.permute.xlu0 %544
  %546 = vrot.lane.b32.xlu0 %v500, 17
  %v547 = vpop.permute.xlu0 %546
  %548 = vrot.lane.b32.xlu0 %v506, 17
  %v549 = vpop.permute.xlu0 %548
  %550 = vrot.lane.b32.xlu0 %v512, 17
  %v551 = vpop.permute.xlu0 %550
  %552 = vrot.lane.b32.xlu0 %v518, 17
  %v553 = vpop.permute.xlu0 %552
  %v554 = vsel %vm45, %v539, %v547
  %v555 = vsel %vm45, %v541, %v549
  %v556 = vsel %vm45, %v543, %v551
  %v557 = vsel %vm45, %v545, %v553
  %v558 = vsel %vm45, %v531, %v539
  %v559 = vsel %vm45, %v533, %v541
  %v560 = vsel %vm45, %v535, %v543
  %v561 = vsel %vm45, %v537, %v545
  %v562 = vsel %vm45, %v523, %v531
  %v563 = vsel %vm45, %v525, %v533
  %v564 = vsel %vm45, %v527, %v535
  %v565 = vsel %vm45, %v529, %v537
  %v566 = vsel %vm45, %v547, %v523
  %v567 = vsel %vm45, %v549, %v525
  %v568 = vsel %vm45, %v551, %v527
  %v569 = vsel %vm45, %v553, %v529
  %v570 = vmul.f32 %v566, %v53
  %v571 = vmul.f32 %v562, %v57
  %v572 = vmul.f32 %v558, %v61
  %v573 = vmul.f32 %v554, %v65
  %v574 = vmul.f32 %v567, %v53
  %v575 = vmul.f32 %v563, %v57
  %v576 = vmul.f32 %v559, %v61
  %v577 = vmul.f32 %v555, %v65
  %v578 = vmul.f32 %v568, %v53
  %v579 = vmul.f32 %v564, %v57
  %v580 = vmul.f32 %v560, %v61
  %v581 = vmul.f32 %v556, %v65
  %v582 = vmul.f32 %v569, %v53
  %v583 = vmul.f32 %v565, %v57
  %v584 = vmul.f32 %v561, %v61
  %v585 = vmul.f32 %v557, %v65
  %586 = vrot.lane.b32.xlu0 %v409, 16
  %v587 = vpop.permute.xlu0 %586
  %588 = vrot.lane.b32.xlu0 %v415, 16
  %v589 = vpop.permute.xlu0 %588
  %590 = vrot.lane.b32.xlu0 %v421, 16
  %v591 = vpop.permute.xlu0 %590
  %592 = vrot.lane.b32.xlu0 %v427, 16
  %v593 = vpop.permute.xlu0 %592
  %594 = vrot.lane.b32.xlu0 %v411, 16
  %v595 = vpop.permute.xlu0 %594
  %596 = vrot.lane.b32.xlu0 %v417, 16
  %v597 = vpop.permute.xlu0 %596
  %598 = vrot.lane.b32.xlu0 %v423, 16
  %v599 = vpop.permute.xlu0 %598
  %600 = vrot.lane.b32.xlu0 %v429, 16
  %v601 = vpop.permute.xlu0 %600
  %602 = vrot.lane.b32.xlu0 %v498, 16
  %v603 = vpop.permute.xlu0 %602
  %604 = vrot.lane.b32.xlu0 %v504, 16
  %v605 = vpop.permute.xlu0 %604
  %606 = vrot.lane.b32.xlu0 %v510, 16
  %v607 = vpop.permute.xlu0 %606
  %608 = vrot.lane.b32.xlu0 %v516, 16
  %v609 = vpop.permute.xlu0 %608
  %610 = vrot.lane.b32.xlu0 %v500, 16
  %v611 = vpop.permute.xlu0 %610
  %612 = vrot.lane.b32.xlu0 %v506, 16
  %v613 = vpop.permute.xlu0 %612
  %614 = vrot.lane.b32.xlu0 %v512, 16
  %v615 = vpop.permute.xlu0 %614
  %616 = vrot.lane.b32.xlu0 %v518, 16
  %v617 = vpop.permute.xlu0 %616
  %v618 = vsel %vm78, %v603, %v611
  %v619 = vsel %vm78, %v605, %v613
  %v620 = vsel %vm78, %v607, %v615
  %v621 = vsel %vm78, %v609, %v617
  %v622 = vsel %vm78, %v595, %v603
  %v623 = vsel %vm78, %v597, %v605
  %v624 = vsel %vm78, %v599, %v607
  %v625 = vsel %vm78, %v601, %v609
  %v626 = vsel %vm78, %v587, %v595
  %v627 = vsel %vm78, %v589, %v597
  %v628 = vsel %vm78, %v591, %v599
  %v629 = vsel %vm78, %v593, %v601
  %v630 = vsel %vm78, %v611, %v587
  %v631 = vsel %vm78, %v613, %v589
  %v632 = vsel %vm78, %v615, %v591
  %v633 = vsel %vm78, %v617, %v593
  %v634 = vmul.f32 %v630, %v86
  %v635 = vmul.f32 %v626, %v90
  %v636 = vmul.f32 %v622, %v94
  %v637 = vmul.f32 %v618, %v98
  %v638 = vmul.f32 %v631, %v86
  %v639 = vmul.f32 %v627, %v90
  %v640 = vmul.f32 %v623, %v94
  %v641 = vmul.f32 %v619, %v98
  %v642 = vmul.f32 %v632, %v86
  %v643 = vmul.f32 %v628, %v90
  %v644 = vmul.f32 %v624, %v94
  %v645 = vmul.f32 %v620, %v98
  %v646 = vmul.f32 %v633, %v86
  %v647 = vmul.f32 %v629, %v90
  %v648 = vmul.f32 %v625, %v94
  %v649 = vmul.f32 %v621, %v98
  %650 = vrot.lane.b32.xlu0 %v409, 15
  %v651 = vpop.permute.xlu0 %650
  %652 = vrot.lane.b32.xlu0 %v415, 15
  %v653 = vpop.permute.xlu0 %652
  %654 = vrot.lane.b32.xlu0 %v421, 15
  %v655 = vpop.permute.xlu0 %654
  %656 = vrot.lane.b32.xlu0 %v427, 15
  %v657 = vpop.permute.xlu0 %656
  %658 = vrot.lane.b32.xlu0 %v411, 15
  %v659 = vpop.permute.xlu0 %658
  %660 = vrot.lane.b32.xlu0 %v417, 15
  %v661 = vpop.permute.xlu0 %660
  %662 = vrot.lane.b32.xlu0 %v423, 15
  %v663 = vpop.permute.xlu0 %662
  %664 = vrot.lane.b32.xlu0 %v429, 15
  %v665 = vpop.permute.xlu0 %664
  %666 = vrot.lane.b32.xlu0 %v498, 15
  %v667 = vpop.permute.xlu0 %666
  %668 = vrot.lane.b32.xlu0 %v504, 15
  %v669 = vpop.permute.xlu0 %668
  %670 = vrot.lane.b32.xlu0 %v510, 15
  %v671 = vpop.permute.xlu0 %670
  %672 = vrot.lane.b32.xlu0 %v516, 15
  %v673 = vpop.permute.xlu0 %672
  %674 = vrot.lane.b32.xlu0 %v500, 15
  %v675 = vpop.permute.xlu0 %674
  %676 = vrot.lane.b32.xlu0 %v506, 15
  %v677 = vpop.permute.xlu0 %676
  %678 = vrot.lane.b32.xlu0 %v512, 15
  %v679 = vpop.permute.xlu0 %678
  %680 = vrot.lane.b32.xlu0 %v518, 15
  %v681 = vpop.permute.xlu0 %680
  %v682 = vsel %vm111, %v667, %v675
  %v683 = vsel %vm111, %v669, %v677
  %v684 = vsel %vm111, %v671, %v679
  %v685 = vsel %vm111, %v673, %v681
  %v686 = vsel %vm111, %v659, %v667
  %v687 = vsel %vm111, %v661, %v669
  %v688 = vsel %vm111, %v663, %v671
  %v689 = vsel %vm111, %v665, %v673
  %v690 = vsel %vm111, %v651, %v659
  %v691 = vsel %vm111, %v653, %v661
  %v692 = vsel %vm111, %v655, %v663
  %v693 = vsel %vm111, %v657, %v665
  %v694 = vsel %vm111, %v675, %v651
  %v695 = vsel %vm111, %v677, %v653
  %v696 = vsel %vm111, %v679, %v655
  %v697 = vsel %vm111, %v681, %v657
  %v698 = vmul.f32 %v694, %v119
  %v699 = vmul.f32 %v690, %v123
  %v700 = vmul.f32 %v686, %v127
  %v701 = vmul.f32 %v682, %v131
  %v702 = vmul.f32 %v695, %v119
  %v703 = vmul.f32 %v691, %v123
  %v704 = vmul.f32 %v687, %v127
  %v705 = vmul.f32 %v683, %v131
  %v706 = vmul.f32 %v696, %v119
  %v707 = vmul.f32 %v692, %v123
  %v708 = vmul.f32 %v688, %v127
  %v709 = vmul.f32 %v684, %v131
  %v710 = vmul.f32 %v697, %v119
  %v711 = vmul.f32 %v693, %v123
  %v712 = vmul.f32 %v689, %v127
  %v713 = vmul.f32 %v685, %v131
  %s714 = scalar_lea.vmem %s3, 16
  %v715 = vld [vmem:[%s714] sm:$0xff]
  %v716 = vld [vmem:[%s714 + $0x8] sm:$0xff]
  %717 = vrot.lane.b32.xlu0 %v409, 1
  %v718 = vpop.permute.xlu0 %717
  %719 = vrot.lane.b32.xlu0 %v415, 1
  %v720 = vpop.permute.xlu0 %719
  %721 = vrot.lane.b32.xlu0 %v421, 1
  %v722 = vpop.permute.xlu0 %721
  %723 = vrot.lane.b32.xlu0 %v427, 1
  %v724 = vpop.permute.xlu0 %723
  %725 = vrot.lane.b32.xlu0 %v411, 1
  %v726 = vpop.permute.xlu0 %725
  %727 = vrot.lane.b32.xlu0 %v417, 1
  %v728 = vpop.permute.xlu0 %727
  %729 = vrot.lane.b32.xlu0 %v423, 1
  %v730 = vpop.permute.xlu0 %729
  %731 = vrot.lane.b32.xlu0 %v429, 1
  %v732 = vpop.permute.xlu0 %731
  %733 = vrot.lane.b32.xlu0 %v498, 1
  %v734 = vpop.permute.xlu0 %733
  %735 = vrot.lane.b32.xlu0 %v504, 1
  %v736 = vpop.permute.xlu0 %735
  %737 = vrot.lane.b32.xlu0 %v510, 1
  %v738 = vpop.permute.xlu0 %737
  %739 = vrot.lane.b32.xlu0 %v516, 1
  %v740 = vpop.permute.xlu0 %739
  %741 = vrot.lane.b32.xlu0 %v500, 1
  %v742 = vpop.permute.xlu0 %741
  %743 = vrot.lane.b32.xlu0 %v506, 1
  %v744 = vpop.permute.xlu0 %743
  %745 = vrot.lane.b32.xlu0 %v512, 1
  %v746 = vpop.permute.xlu0 %745
  %747 = vrot.lane.b32.xlu0 %v518, 1
  %v748 = vpop.permute.xlu0 %747
  %v749 = vsel %vm144, %v734, %v742
  %v750 = vsel %vm144, %v736, %v744
  %v751 = vsel %vm144, %v738, %v746
  %v752 = vsel %vm144, %v740, %v748
  %v753 = vsel %vm144, %v726, %v734
  %v754 = vsel %vm144, %v728, %v736
  %v755 = vsel %vm144, %v730, %v738
  %v756 = vsel %vm144, %v732, %v740
  %v757 = vsel %vm144, %v718, %v726
  %v758 = vsel %vm144, %v720, %v728
  %v759 = vsel %vm144, %v722, %v730
  %v760 = vsel %vm144, %v724, %v732
  %v761 = vsel %vm144, %v742, %v718
  %v762 = vsel %vm144, %v744, %v720
  %v763 = vsel %vm144, %v746, %v722
  %v764 = vsel %vm144, %v748, %v724
  %v765 = vmul.f32 %v761, %v152
  %v766 = vmul.f32 %v757, %v156
  %v767 = vmul.f32 %v753, %v160
  %v768 = vmul.f32 %v749, %v164
  %v769 = vmul.f32 %v762, %v152
  %v770 = vmul.f32 %v758, %v156
  %v771 = vmul.f32 %v754, %v160
  %v772 = vmul.f32 %v750, %v164
  %v773 = vmul.f32 %v763, %v152
  %v774 = vmul.f32 %v759, %v156
  %v775 = vmul.f32 %v755, %v160
  %v776 = vmul.f32 %v751, %v164
  %v777 = vmul.f32 %v764, %v152
  %v778 = vmul.f32 %v760, %v156
  %v779 = vmul.f32 %v756, %v160
  %v780 = vmul.f32 %v752, %v164
  %781 = vrot.lane.b32.xlu0 %v409, 127
  %v782 = vpop.permute.xlu0 %781
  %783 = vrot.lane.b32.xlu0 %v415, 127
  %v784 = vpop.permute.xlu0 %783
  %785 = vrot.lane.b32.xlu0 %v421, 127
  %v786 = vpop.permute.xlu0 %785
  %787 = vrot.lane.b32.xlu0 %v427, 127
  %v788 = vpop.permute.xlu0 %787
  %789 = vrot.lane.b32.xlu0 %v411, 127
  %v790 = vpop.permute.xlu0 %789
  %791 = vrot.lane.b32.xlu0 %v417, 127
  %v792 = vpop.permute.xlu0 %791
  %793 = vrot.lane.b32.xlu0 %v423, 127
  %v794 = vpop.permute.xlu0 %793
  %795 = vrot.lane.b32.xlu0 %v429, 127
  %v796 = vpop.permute.xlu0 %795
  %797 = vrot.lane.b32.xlu0 %v498, 127
  %v798 = vpop.permute.xlu0 %797
  %799 = vrot.lane.b32.xlu0 %v504, 127
  %v800 = vpop.permute.xlu0 %799
  %801 = vrot.lane.b32.xlu0 %v510, 127
  %v802 = vpop.permute.xlu0 %801
  %803 = vrot.lane.b32.xlu0 %v516, 127
  %v804 = vpop.permute.xlu0 %803
  %805 = vrot.lane.b32.xlu0 %v500, 127
  %v806 = vpop.permute.xlu0 %805
  %807 = vrot.lane.b32.xlu0 %v506, 127
  %v808 = vpop.permute.xlu0 %807
  %809 = vrot.lane.b32.xlu0 %v512, 127
  %v810 = vpop.permute.xlu0 %809
  %811 = vrot.lane.b32.xlu0 %v518, 127
  %v812 = vpop.permute.xlu0 %811
  %v813 = vsel %vm177, %v798, %v806
  %v814 = vsel %vm177, %v800, %v808
  %v815 = vsel %vm177, %v802, %v810
  %v816 = vsel %vm177, %v804, %v812
  %v817 = vsel %vm177, %v790, %v798
  %v818 = vsel %vm177, %v792, %v800
  %v819 = vsel %vm177, %v794, %v802
  %v820 = vsel %vm177, %v796, %v804
  %v821 = vsel %vm177, %v782, %v790
  %v822 = vsel %vm177, %v784, %v792
  %v823 = vsel %vm177, %v786, %v794
  %v824 = vsel %vm177, %v788, %v796
  %v825 = vsel %vm177, %v806, %v782
  %v826 = vsel %vm177, %v808, %v784
  %v827 = vsel %vm177, %v810, %v786
  %v828 = vsel %vm177, %v812, %v788
  %v829 = vmul.f32 %v821, %v185
  %v830 = vmul.f32 %v817, %v189
  %v831 = vmul.f32 %v813, %v193
  %v832 = vmul.f32 %v825, %v197
  %v833 = vmul.f32 %v822, %v185
  %v834 = vmul.f32 %v818, %v189
  %v835 = vmul.f32 %v814, %v193
  %v836 = vmul.f32 %v826, %v197
  %v837 = vmul.f32 %v823, %v185
  %v838 = vmul.f32 %v819, %v189
  %v839 = vmul.f32 %v815, %v193
  %v840 = vmul.f32 %v827, %v197
  %v841 = vmul.f32 %v824, %v185
  %v842 = vmul.f32 %v820, %v189
  %v843 = vmul.f32 %v816, %v193
  %v844 = vmul.f32 %v828, %v197
  %vm845 = vcmask 785408
  %v847 = vsel %vm845, %v715, 0
  %v850 = vsel %vm845, %v716, 0
  %852 = vmatprep.subr.mxu0 0.0
  %853 = vmatpush1.msra.mxu0 0.0
  %854 = vmatprep.subr.mxu0 0.0
  %855 = vmatpush1.msra.mxu0 0.0
  %856 = vmatprep.subr.mxu0 0.0
  %857 = vmatpush1.msra.mxu0 0.0
  %858 = vmatprep.subr.mxu0 0.0
  %859 = vmatpush1.msra.mxu0 0.0
  %860 = vmatprep.subr.mxu0 %v842
  %861 = vmatpush1.msra.mxu0 %v841
  %862 = vmatprep.subr.mxu0 %v838
  %863 = vmatpush1.msra.mxu0 %v837
  %864 = vmatprep.subr.mxu0 %v834
  %865 = vmatpush1.msra.mxu0 %v833
  %866 = vmatprep.subr.mxu0 %v830
  %867 = vmatpush1.msra.mxu0 %v829
  %868 = vmatprep.subr.mxu0 %v429
  %869 = vmatpush1.msra.mxu0 %v427
  %870 = vmatprep.subr.mxu0 %v423
  %871 = vmatpush1.msra.mxu0 %v421
  %872 = vmatprep.subr.mxu0 %v417
  %873 = vmatpush1.msra.mxu0 %v415
  %874 = vmatprep.subr.mxu0 %v411
  %875 = vmatpush1.msra.mxu0 %v409
  %876 = vmatprep.subr.mxu0 %v778
  %877 = vmatpush1.msra.mxu0 %v777
  %878 = vmatprep.subr.mxu0 %v774
  %879 = vmatpush1.msra.mxu0 %v773
  %880 = vmatprep.subr.mxu0 %v770
  %881 = vmatpush1.msra.mxu0 %v769
  %882 = vmatprep.subr.mxu0 %v766
  %883 = vmatpush1.msra.mxu0 %v765
  %884 = vmatprep.subr.mxu0 0.0
  %885 = vmatpush2.msra.mxu0 0.0
  %886 = vmatprep.subr.mxu0 0.0
  %887 = vmatpush2.msra.mxu0 0.0
  %888 = vmatprep.subr.mxu0 0.0
  %889 = vmatpush2.msra.mxu0 0.0
  %890 = vmatprep.subr.mxu0 0.0
  %891 = vmatpush2.msra.mxu0 0.0
  %892 = vmatprep.subr.mxu0 0.0
  %893 = vmatpush2.msra.mxu0 0.0
  %894 = vmatprep.subr.mxu0 0.0
  %895 = vmatpush2.msra.mxu0 0.0
  %896 = vmatprep.subr.mxu0 0.0
  %897 = vmatpush2.msra.mxu0 0.0
  %898 = vmatprep.subr.mxu0 0.0
  %899 = vmatpush2.msra.mxu0 0.0
  %900 = vmatprep.subr.mxu0 0.0
  %901 = vmatpush2.msra.mxu0 0.0
  %902 = vmatprep.subr.mxu0 0.0
  %903 = vmatpush2.msra.mxu0 0.0
  %904 = vmatprep.subr.mxu0 0.0
  %905 = vmatpush2.msra.mxu0 0.0
  %906 = vmatprep.subr.mxu0 0.0
  %907 = vmatpush2.msra.mxu0 0.0
  %908 = vmatprep.subr.mxu0 0.0
  %909 = vmatpush2.msra.mxu0 0.0
  %910 = vmatprep.subr.mxu0 0.0
  %911 = vmatpush2.msra.mxu0 0.0
  %912 = vmatprep.subr.mxu0 0.0
  %913 = vmatpush2.msra.mxu0 0.0
  %914 = vmatprep.subr.mxu0 0.0
  %915 = vmatpush2.msra.mxu0 0.0
  %916 = vmatprep.mubr.f32.mxu0 0.0
  %917 = vmatmul.mubr.f32.gmra.mxu0 %v847
  %v918 = vpop.f32.mrf.mxu0
  %v919 = vadd.f32 0.0, %v918
  %v920 = vpop.f32.mrf.mxu0
  %v921 = vadd.f32 0.0, %v920
  %922 = vmatprep.mubr.f32.mxu0 0.0
  %923 = vmatmul.mubr.f32.gmra.mxu0 %v850
  %v924 = vpop.f32.mrf.mxu0
  %v925 = vadd.f32 0.0, %v924
  %v926 = vpop.f32.mrf.mxu0
  %v927 = vadd.f32 0.0, %v926
  %928 = vdwg.mxu0
  %929 = vmatprep.subr.mxu0 0.0
  %930 = vmatpush1.msra.mxu0 0.0
  %931 = vmatprep.subr.mxu0 0.0
  %932 = vmatpush1.msra.mxu0 0.0
  %933 = vmatprep.subr.mxu0 0.0
  %934 = vmatpush1.msra.mxu0 0.0
  %935 = vmatprep.subr.mxu0 0.0
  %936 = vmatpush1.msra.mxu0 0.0
  %937 = vmatprep.subr.mxu0 %v844
  %938 = vmatpush1.msra.mxu0 %v843
  %939 = vmatprep.subr.mxu0 %v840
  %940 = vmatpush1.msra.mxu0 %v839
  %941 = vmatprep.subr.mxu0 %v836
  %942 = vmatpush1.msra.mxu0 %v835
  %943 = vmatprep.subr.mxu0 %v832
  %944 = vmatpush1.msra.mxu0 %v831
  %945 = vmatprep.subr.mxu0 %v518
  %946 = vmatpush1.msra.mxu0 %v516
  %947 = vmatprep.subr.mxu0 %v512
  %948 = vmatpush1.msra.mxu0 %v510
  %949 = vmatprep.subr.mxu0 %v506
  %950 = vmatpush1.msra.mxu0 %v504
  %951 = vmatprep.subr.mxu0 %v500
  %952 = vmatpush1.msra.mxu0 %v498
  %953 = vmatprep.subr.mxu0 %v780
  %954 = vmatpush1.msra.mxu0 %v779
  %955 = vmatprep.subr.mxu0 %v776
  %956 = vmatpush1.msra.mxu0 %v775
  %957 = vmatprep.subr.mxu0 %v772
  %958 = vmatpush1.msra.mxu0 %v771
  %959 = vmatprep.subr.mxu0 %v768
  %960 = vmatpush1.msra.mxu0 %v767
  %961 = vmatprep.subr.mxu0 0.0
  %962 = vmatpush2.msra.mxu0 0.0
  %963 = vmatprep.subr.mxu0 0.0
  %964 = vmatpush2.msra.mxu0 0.0
  %965 = vmatprep.subr.mxu0 0.0
  %966 = vmatpush2.msra.mxu0 0.0
  %967 = vmatprep.subr.mxu0 0.0
  %968 = vmatpush2.msra.mxu0 0.0
  %969 = vmatprep.subr.mxu0 0.0
  %970 = vmatpush2.msra.mxu0 0.0
  %971 = vmatprep.subr.mxu0 0.0
  %972 = vmatpush2.msra.mxu0 0.0
  %973 = vmatprep.subr.mxu0 0.0
  %974 = vmatpush2.msra.mxu0 0.0
  %975 = vmatprep.subr.mxu0 0.0
  %976 = vmatpush2.msra.mxu0 0.0
  %977 = vmatprep.subr.mxu0 0.0
  %978 = vmatpush2.msra.mxu0 0.0
  %979 = vmatprep.subr.mxu0 0.0
  %980 = vmatpush2.msra.mxu0 0.0
  %981 = vmatprep.subr.mxu0 0.0
  %982 = vmatpush2.msra.mxu0 0.0
  %983 = vmatprep.subr.mxu0 0.0
  %984 = vmatpush2.msra.mxu0 0.0
  %985 = vmatprep.subr.mxu0 0.0
  %986 = vmatpush2.msra.mxu0 0.0
  %987 = vmatprep.subr.mxu0 0.0
  %988 = vmatpush2.msra.mxu0 0.0
  %989 = vmatprep.subr.mxu0 0.0
  %990 = vmatpush2.msra.mxu0 0.0
  %991 = vmatprep.subr.mxu0 0.0
  %992 = vmatpush2.msra.mxu0 0.0
  %993 = vmatprep.mubr.f32.mxu0 0.0
  %994 = vmatmul.mubr.f32.gmra.mxu0 %v847
  %v995 = vpop.f32.mrf.mxu0
  %v996 = vadd.f32 0.0, %v995
  %v997 = vpop.f32.mrf.mxu0
  %v998 = vadd.f32 0.0, %v997
  %999 = vmatprep.mubr.f32.mxu0 0.0
  %1000 = vmatmul.mubr.f32.gmra.mxu0 %v850
  %v1001 = vpop.f32.mrf.mxu0
  %v1002 = vadd.f32 0.0, %v1001
  %v1003 = vpop.f32.mrf.mxu0
  %v1004 = vadd.f32 0.0, %v1003
  %1005 = vdwg.mxu0
  %v1007 = vsel %vm845, %v520, 0
  %v1010 = vsel %vm845, %v521, 0
  %1012 = vmatprep.subr.mxu0 0.0
  %1013 = vmatpush1.msra.mxu0 0.0
  %1014 = vmatprep.subr.mxu0 0.0
  %1015 = vmatpush1.msra.mxu0 0.0
  %1016 = vmatprep.subr.mxu0 0.0
  %1017 = vmatpush1.msra.mxu0 0.0
  %1018 = vmatprep.subr.mxu0 0.0
  %1019 = vmatpush1.msra.mxu0 0.0
  %1020 = vmatprep.subr.mxu0 %v711
  %1021 = vmatpush1.msra.mxu0 %v710
  %1022 = vmatprep.subr.mxu0 %v707
  %1023 = vmatpush1.msra.mxu0 %v706
  %1024 = vmatprep.subr.mxu0 %v703
  %1025 = vmatpush1.msra.mxu0 %v702
  %1026 = vmatprep.subr.mxu0 %v699
  %1027 = vmatpush1.msra.mxu0 %v698
  %1028 = vmatprep.subr.mxu0 %v647
  %1029 = vmatpush1.msra.mxu0 %v646
  %1030 = vmatprep.subr.mxu0 %v643
  %1031 = vmatpush1.msra.mxu0 %v642
  %1032 = vmatprep.subr.mxu0 %v639
  %1033 = vmatpush1.msra.mxu0 %v638
  %1034 = vmatprep.subr.mxu0 %v635
  %1035 = vmatpush1.msra.mxu0 %v634
  %1036 = vmatprep.subr.mxu0 %v583
  %1037 = vmatpush1.msra.mxu0 %v582
  %1038 = vmatprep.subr.mxu0 %v579
  %1039 = vmatpush1.msra.mxu0 %v578
  %1040 = vmatprep.subr.mxu0 %v575
  %1041 = vmatpush1.msra.mxu0 %v574
  %1042 = vmatprep.subr.mxu0 %v571
  %1043 = vmatpush1.msra.mxu0 %v570
  %1044 = vmatprep.subr.mxu0 0.0
  %1045 = vmatpush2.msra.mxu0 0.0
  %1046 = vmatprep.subr.mxu0 0.0
  %1047 = vmatpush2.msra.mxu0 0.0
  %1048 = vmatprep.subr.mxu0 0.0
  %1049 = vmatpush2.msra.mxu0 0.0
  %1050 = vmatprep.subr.mxu0 0.0
  %1051 = vmatpush2.msra.mxu0 0.0
  %1052 = vmatprep.subr.mxu0 0.0
  %1053 = vmatpush2.msra.mxu0 0.0
  %1054 = vmatprep.subr.mxu0 0.0
  %1055 = vmatpush2.msra.mxu0 0.0
  %1056 = vmatprep.subr.mxu0 0.0
  %1057 = vmatpush2.msra.mxu0 0.0
  %1058 = vmatprep.subr.mxu0 0.0
  %1059 = vmatpush2.msra.mxu0 0.0
  %1060 = vmatprep.subr.mxu0 0.0
  %1061 = vmatpush2.msra.mxu0 0.0
  %1062 = vmatprep.subr.mxu0 0.0
  %1063 = vmatpush2.msra.mxu0 0.0
  %1064 = vmatprep.subr.mxu0 0.0
  %1065 = vmatpush2.msra.mxu0 0.0
  %1066 = vmatprep.subr.mxu0 0.0
  %1067 = vmatpush2.msra.mxu0 0.0
  %1068 = vmatprep.subr.mxu0 0.0
  %1069 = vmatpush2.msra.mxu0 0.0
  %1070 = vmatprep.subr.mxu0 0.0
  %1071 = vmatpush2.msra.mxu0 0.0
  %1072 = vmatprep.subr.mxu0 0.0
  %1073 = vmatpush2.msra.mxu0 0.0
  %1074 = vmatprep.subr.mxu0 0.0
  %1075 = vmatpush2.msra.mxu0 0.0
  %1076 = vmatprep.mubr.f32.mxu0 0.0
  %1077 = vmatmul.mubr.f32.gmra.mxu0 %v1007
  %v1078 = vpop.f32.mrf.mxu0
  %v1079 = vadd.f32 %v919, %v1078
  %v1080 = vpop.f32.mrf.mxu0
  %v1081 = vadd.f32 %v921, %v1080
  %1082 = vmatprep.mubr.f32.mxu0 0.0
  %1083 = vmatmul.mubr.f32.gmra.mxu0 %v1010
  %v1084 = vpop.f32.mrf.mxu0
  %v1085 = vadd.f32 %v925, %v1084
  %v1086 = vpop.f32.mrf.mxu0
  %v1087 = vadd.f32 %v927, %v1086
  %1088 = vdwg.mxu0
  %1089 = vmatprep.subr.mxu0 0.0
  %1090 = vmatpush1.msra.mxu0 0.0
  %1091 = vmatprep.subr.mxu0 0.0
  %1092 = vmatpush1.msra.mxu0 0.0
  %1093 = vmatprep.subr.mxu0 0.0
  %1094 = vmatpush1.msra.mxu0 0.0
  %1095 = vmatprep.subr.mxu0 0.0
  %1096 = vmatpush1.msra.mxu0 0.0
  %1097 = vmatprep.subr.mxu0 %v713
  %1098 = vmatpush1.msra.mxu0 %v712
  %1099 = vmatprep.subr.mxu0 %v709
  %1100 = vmatpush1.msra.mxu0 %v708
  %1101 = vmatprep.subr.mxu0 %v705
  %1102 = vmatpush1.msra.mxu0 %v704
  %1103 = vmatprep.subr.mxu0 %v701
  %1104 = vmatpush1.msra.mxu0 %v700
  %1105 = vmatprep.subr.mxu0 %v649
  %1106 = vmatpush1.msra.mxu0 %v648
  %1107 = vmatprep.subr.mxu0 %v645
  %1108 = vmatpush1.msra.mxu0 %v644
  %1109 = vmatprep.subr.mxu0 %v641
  %1110 = vmatpush1.msra.mxu0 %v640
  %1111 = vmatprep.subr.mxu0 %v637
  %1112 = vmatpush1.msra.mxu0 %v636
  %1113 = vmatprep.subr.mxu0 %v585
  %1114 = vmatpush1.msra.mxu0 %v584
  %1115 = vmatprep.subr.mxu0 %v581
  %1116 = vmatpush1.msra.mxu0 %v580
  %1117 = vmatprep.subr.mxu0 %v577
  %1118 = vmatpush1.msra.mxu0 %v576
  %1119 = vmatprep.subr.mxu0 %v573
  %1120 = vmatpush1.msra.mxu0 %v572
  %1121 = vmatprep.subr.mxu0 0.0
  %1122 = vmatpush2.msra.mxu0 0.0
  %1123 = vmatprep.subr.mxu0 0.0
  %1124 = vmatpush2.msra.mxu0 0.0
  %1125 = vmatprep.subr.mxu0 0.0
  %1126 = vmatpush2.msra.mxu0 0.0
  %1127 = vmatprep.subr.mxu0 0.0
  %1128 = vmatpush2.msra.mxu0 0.0
  %1129 = vmatprep.subr.mxu0 0.0
  %1130 = vmatpush2.msra.mxu0 0.0
  %1131 = vmatprep.subr.mxu0 0.0
  %1132 = vmatpush2.msra.mxu0 0.0
  %1133 = vmatprep.subr.mxu0 0.0
  %1134 = vmatpush2.msra.mxu0 0.0
  %1135 = vmatprep.subr.mxu0 0.0
  %1136 = vmatpush2.msra.mxu0 0.0
  %1137 = vmatprep.subr.mxu0 0.0
  %1138 = vmatpush2.msra.mxu0 0.0
  %1139 = vmatprep.subr.mxu0 0.0
  %1140 = vmatpush2.msra.mxu0 0.0
  %1141 = vmatprep.subr.mxu0 0.0
  %1142 = vmatpush2.msra.mxu0 0.0
  %1143 = vmatprep.subr.mxu0 0.0
  %1144 = vmatpush2.msra.mxu0 0.0
  %1145 = vmatprep.subr.mxu0 0.0
  %1146 = vmatpush2.msra.mxu0 0.0
  %1147 = vmatprep.subr.mxu0 0.0
  %1148 = vmatpush2.msra.mxu0 0.0
  %1149 = vmatprep.subr.mxu0 0.0
  %1150 = vmatpush2.msra.mxu0 0.0
  %1151 = vmatprep.subr.mxu0 0.0
  %1152 = vmatpush2.msra.mxu0 0.0
  %1153 = vmatprep.mubr.f32.mxu0 0.0
  %1154 = vmatmul.mubr.f32.gmra.mxu0 %v1007
  %v1155 = vpop.f32.mrf.mxu0
  %v1156 = vadd.f32 %v996, %v1155
  %v1157 = vpop.f32.mrf.mxu0
  %v1158 = vadd.f32 %v998, %v1157
  %1159 = vmatprep.mubr.f32.mxu0 0.0
  %1160 = vmatmul.mubr.f32.gmra.mxu0 %v1010
  %v1161 = vpop.f32.mrf.mxu0
  %v1162 = vadd.f32 %v1002, %v1161
  %v1163 = vpop.f32.mrf.mxu0
  %v1164 = vadd.f32 %v1004, %v1163
  %1165 = vdwg.mxu0
  %s1166 = scalar_lea.vmem %s3, 32
  %v1167 = vld [vmem:[%s1166] sm:$0xff]
  %v1168 = vld [vmem:[%s1166 + $0x8] sm:$0xff]
  %1169 = vrot.lane.b32.xlu0 %v409, 113
  %v1170 = vpop.permute.xlu0 %1169
  %1171 = vrot.lane.b32.xlu0 %v415, 113
  %v1172 = vpop.permute.xlu0 %1171
  %1173 = vrot.lane.b32.xlu0 %v421, 113
  %v1174 = vpop.permute.xlu0 %1173
  %1175 = vrot.lane.b32.xlu0 %v427, 113
  %v1176 = vpop.permute.xlu0 %1175
  %1177 = vrot.lane.b32.xlu0 %v411, 113
  %v1178 = vpop.permute.xlu0 %1177
  %1179 = vrot.lane.b32.xlu0 %v417, 113
  %v1180 = vpop.permute.xlu0 %1179
  %1181 = vrot.lane.b32.xlu0 %v423, 113
  %v1182 = vpop.permute.xlu0 %1181
  %1183 = vrot.lane.b32.xlu0 %v429, 113
  %v1184 = vpop.permute.xlu0 %1183
  %1185 = vrot.lane.b32.xlu0 %v498, 113
  %v1186 = vpop.permute.xlu0 %1185
  %1187 = vrot.lane.b32.xlu0 %v504, 113
  %v1188 = vpop.permute.xlu0 %1187
  %1189 = vrot.lane.b32.xlu0 %v510, 113
  %v1190 = vpop.permute.xlu0 %1189
  %1191 = vrot.lane.b32.xlu0 %v516, 113
  %v1192 = vpop.permute.xlu0 %1191
  %1193 = vrot.lane.b32.xlu0 %v500, 113
  %v1194 = vpop.permute.xlu0 %1193
  %1195 = vrot.lane.b32.xlu0 %v506, 113
  %v1196 = vpop.permute.xlu0 %1195
  %1197 = vrot.lane.b32.xlu0 %v512, 113
  %v1198 = vpop.permute.xlu0 %1197
  %1199 = vrot.lane.b32.xlu0 %v518, 113
  %v1200 = vpop.permute.xlu0 %1199
  %v1201 = vsel %vm210, %v1186, %v1194
  %v1202 = vsel %vm210, %v1188, %v1196
  %v1203 = vsel %vm210, %v1190, %v1198
  %v1204 = vsel %vm210, %v1192, %v1200
  %v1205 = vsel %vm210, %v1178, %v1186
  %v1206 = vsel %vm210, %v1180, %v1188
  %v1207 = vsel %vm210, %v1182, %v1190
  %v1208 = vsel %vm210, %v1184, %v1192
  %v1209 = vsel %vm210, %v1170, %v1178
  %v1210 = vsel %vm210, %v1172, %v1180
  %v1211 = vsel %vm210, %v1174, %v1182
  %v1212 = vsel %vm210, %v1176, %v1184
  %v1213 = vsel %vm210, %v1194, %v1170
  %v1214 = vsel %vm210, %v1196, %v1172
  %v1215 = vsel %vm210, %v1198, %v1174
  %v1216 = vsel %vm210, %v1200, %v1176
  %v1217 = vmul.f32 %v1209, %v218
  %v1218 = vmul.f32 %v1205, %v222
  %v1219 = vmul.f32 %v1201, %v226
  %v1220 = vmul.f32 %v1213, %v230
  %v1221 = vmul.f32 %v1210, %v218
  %v1222 = vmul.f32 %v1206, %v222
  %v1223 = vmul.f32 %v1202, %v226
  %v1224 = vmul.f32 %v1214, %v230
  %v1225 = vmul.f32 %v1211, %v218
  %v1226 = vmul.f32 %v1207, %v222
  %v1227 = vmul.f32 %v1203, %v226
  %v1228 = vmul.f32 %v1215, %v230
  %v1229 = vmul.f32 %v1212, %v218
  %v1230 = vmul.f32 %v1208, %v222
  %v1231 = vmul.f32 %v1204, %v226
  %v1232 = vmul.f32 %v1216, %v230
  %1233 = vrot.lane.b32.xlu0 %v409, 112
  %v1234 = vpop.permute.xlu0 %1233
  %1235 = vrot.lane.b32.xlu0 %v415, 112
  %v1236 = vpop.permute.xlu0 %1235
  %1237 = vrot.lane.b32.xlu0 %v421, 112
  %v1238 = vpop.permute.xlu0 %1237
  %1239 = vrot.lane.b32.xlu0 %v427, 112
  %v1240 = vpop.permute.xlu0 %1239
  %1241 = vrot.lane.b32.xlu0 %v411, 112
  %v1242 = vpop.permute.xlu0 %1241
  %1243 = vrot.lane.b32.xlu0 %v417, 112
  %v1244 = vpop.permute.xlu0 %1243
  %1245 = vrot.lane.b32.xlu0 %v423, 112
  %v1246 = vpop.permute.xlu0 %1245
  %1247 = vrot.lane.b32.xlu0 %v429, 112
  %v1248 = vpop.permute.xlu0 %1247
  %1249 = vrot.lane.b32.xlu0 %v498, 112
  %v1250 = vpop.permute.xlu0 %1249
  %1251 = vrot.lane.b32.xlu0 %v504, 112
  %v1252 = vpop.permute.xlu0 %1251
  %1253 = vrot.lane.b32.xlu0 %v510, 112
  %v1254 = vpop.permute.xlu0 %1253
  %1255 = vrot.lane.b32.xlu0 %v516, 112
  %v1256 = vpop.permute.xlu0 %1255
  %1257 = vrot.lane.b32.xlu0 %v500, 112
  %v1258 = vpop.permute.xlu0 %1257
  %1259 = vrot.lane.b32.xlu0 %v506, 112
  %v1260 = vpop.permute.xlu0 %1259
  %1261 = vrot.lane.b32.xlu0 %v512, 112
  %v1262 = vpop.permute.xlu0 %1261
  %1263 = vrot.lane.b32.xlu0 %v518, 112
  %v1264 = vpop.permute.xlu0 %1263
  %v1265 = vsel %vm243, %v1250, %v1258
  %v1266 = vsel %vm243, %v1252, %v1260
  %v1267 = vsel %vm243, %v1254, %v1262
  %v1268 = vsel %vm243, %v1256, %v1264
  %v1269 = vsel %vm243, %v1242, %v1250
  %v1270 = vsel %vm243, %v1244, %v1252
  %v1271 = vsel %vm243, %v1246, %v1254
  %v1272 = vsel %vm243, %v1248, %v1256
  %v1273 = vsel %vm243, %v1234, %v1242
  %v1274 = vsel %vm243, %v1236, %v1244
  %v1275 = vsel %vm243, %v1238, %v1246
  %v1276 = vsel %vm243, %v1240, %v1248
  %v1277 = vsel %vm243, %v1258, %v1234
  %v1278 = vsel %vm243, %v1260, %v1236
  %v1279 = vsel %vm243, %v1262, %v1238
  %v1280 = vsel %vm243, %v1264, %v1240
  %v1281 = vmul.f32 %v1273, %v251
  %v1282 = vmul.f32 %v1269, %v255
  %v1283 = vmul.f32 %v1265, %v259
  %v1284 = vmul.f32 %v1277, %v263
  %v1285 = vmul.f32 %v1274, %v251
  %v1286 = vmul.f32 %v1270, %v255
  %v1287 = vmul.f32 %v1266, %v259
  %v1288 = vmul.f32 %v1278, %v263
  %v1289 = vmul.f32 %v1275, %v251
  %v1290 = vmul.f32 %v1271, %v255
  %v1291 = vmul.f32 %v1267, %v259
  %v1292 = vmul.f32 %v1279, %v263
  %v1293 = vmul.f32 %v1276, %v251
  %v1294 = vmul.f32 %v1272, %v255
  %v1295 = vmul.f32 %v1268, %v259
  %v1296 = vmul.f32 %v1280, %v263
  %1297 = vrot.lane.b32.xlu0 %v409, 111
  %v1298 = vpop.permute.xlu0 %1297
  %1299 = vrot.lane.b32.xlu0 %v415, 111
  %v1300 = vpop.permute.xlu0 %1299
  %1301 = vrot.lane.b32.xlu0 %v421, 111
  %v1302 = vpop.permute.xlu0 %1301
  %1303 = vrot.lane.b32.xlu0 %v427, 111
  %v1304 = vpop.permute.xlu0 %1303
  %1305 = vrot.lane.b32.xlu0 %v411, 111
  %v1306 = vpop.permute.xlu0 %1305
  %1307 = vrot.lane.b32.xlu0 %v417, 111
  %v1308 = vpop.permute.xlu0 %1307
  %1309 = vrot.lane.b32.xlu0 %v423, 111
  %v1310 = vpop.permute.xlu0 %1309
  %1311 = vrot.lane.b32.xlu0 %v429, 111
  %v1312 = vpop.permute.xlu0 %1311
  %1313 = vrot.lane.b32.xlu0 %v498, 111
  %v1314 = vpop.permute.xlu0 %1313
  %1315 = vrot.lane.b32.xlu0 %v504, 111
  %v1316 = vpop.permute.xlu0 %1315
  %1317 = vrot.lane.b32.xlu0 %v510, 111
  %v1318 = vpop.permute.xlu0 %1317
  %1319 = vrot.lane.b32.xlu0 %v516, 111
  %v1320 = vpop.permute.xlu0 %1319
  %1321 = vrot.lane.b32.xlu0 %v500, 111
  %v1322 = vpop.permute.xlu0 %1321
  %1323 = vrot.lane.b32.xlu0 %v506, 111
  %v1324 = vpop.permute.xlu0 %1323
  %1325 = vrot.lane.b32.xlu0 %v512, 111
  %v1326 = vpop.permute.xlu0 %1325
  %1327 = vrot.lane.b32.xlu0 %v518, 111
  %v1328 = vpop.permute.xlu0 %1327
  %v1329 = vsel %vm276, %v1314, %v1322
  %v1330 = vsel %vm276, %v1316, %v1324
  %v1331 = vsel %vm276, %v1318, %v1326
  %v1332 = vsel %vm276, %v1320, %v1328
  %v1333 = vsel %vm276, %v1306, %v1314
  %v1334 = vsel %vm276, %v1308, %v1316
  %v1335 = vsel %vm276, %v1310, %v1318
  %v1336 = vsel %vm276, %v1312, %v1320
  %v1337 = vsel %vm276, %v1298, %v1306
  %v1338 = vsel %vm276, %v1300, %v1308
  %v1339 = vsel %vm276, %v1302, %v1310
  %v1340 = vsel %vm276, %v1304, %v1312
  %v1341 = vsel %vm276, %v1322, %v1298
  %v1342 = vsel %vm276, %v1324, %v1300
  %v1343 = vsel %vm276, %v1326, %v1302
  %v1344 = vsel %vm276, %v1328, %v1304
  %v1345 = vmul.f32 %v1337, %v284
  %v1346 = vmul.f32 %v1333, %v288
  %v1347 = vmul.f32 %v1329, %v292
  %v1348 = vmul.f32 %v1341, %v296
  %v1349 = vmul.f32 %v1338, %v284
  %v1350 = vmul.f32 %v1334, %v288
  %v1351 = vmul.f32 %v1330, %v292
  %v1352 = vmul.f32 %v1342, %v296
  %v1353 = vmul.f32 %v1339, %v284
  %v1354 = vmul.f32 %v1335, %v288
  %v1355 = vmul.f32 %v1331, %v292
  %v1356 = vmul.f32 %v1343, %v296
  %v1357 = vmul.f32 %v1340, %v284
  %v1358 = vmul.f32 %v1336, %v288
  %v1359 = vmul.f32 %v1332, %v292
  %v1360 = vmul.f32 %v1344, %v296
  %v1362 = vsel %vm845, %v1167, 0
  %v1365 = vsel %vm845, %v1168, 0
  %1367 = vmatprep.subr.mxu0 0.0
  %1368 = vmatpush1.msra.mxu0 0.0
  %1369 = vmatprep.subr.mxu0 0.0
  %1370 = vmatpush1.msra.mxu0 0.0
  %1371 = vmatprep.subr.mxu0 0.0
  %1372 = vmatpush1.msra.mxu0 0.0
  %1373 = vmatprep.subr.mxu0 0.0
  %1374 = vmatpush1.msra.mxu0 0.0
  %1375 = vmatprep.subr.mxu0 %v1358
  %1376 = vmatpush1.msra.mxu0 %v1357
  %1377 = vmatprep.subr.mxu0 %v1354
  %1378 = vmatpush1.msra.mxu0 %v1353
  %1379 = vmatprep.subr.mxu0 %v1350
  %1380 = vmatpush1.msra.mxu0 %v1349
  %1381 = vmatprep.subr.mxu0 %v1346
  %1382 = vmatpush1.msra.mxu0 %v1345
  %1383 = vmatprep.subr.mxu0 %v1294
  %1384 = vmatpush1.msra.mxu0 %v1293
  %1385 = vmatprep.subr.mxu0 %v1290
  %1386 = vmatpush1.msra.mxu0 %v1289
  %1387 = vmatprep.subr.mxu0 %v1286
  %1388 = vmatpush1.msra.mxu0 %v1285
  %1389 = vmatprep.subr.mxu0 %v1282
  %1390 = vmatpush1.msra.mxu0 %v1281
  %1391 = vmatprep.subr.mxu0 %v1230
  %1392 = vmatpush1.msra.mxu0 %v1229
  %1393 = vmatprep.subr.mxu0 %v1226
  %1394 = vmatpush1.msra.mxu0 %v1225
  %1395 = vmatprep.subr.mxu0 %v1222
  %1396 = vmatpush1.msra.mxu0 %v1221
  %1397 = vmatprep.subr.mxu0 %v1218
  %1398 = vmatpush1.msra.mxu0 %v1217
  %1399 = vmatprep.subr.mxu0 0.0
  %1400 = vmatpush2.msra.mxu0 0.0
  %1401 = vmatprep.subr.mxu0 0.0
  %1402 = vmatpush2.msra.mxu0 0.0
  %1403 = vmatprep.subr.mxu0 0.0
  %1404 = vmatpush2.msra.mxu0 0.0
  %1405 = vmatprep.subr.mxu0 0.0
  %1406 = vmatpush2.msra.mxu0 0.0
  %1407 = vmatprep.subr.mxu0 0.0
  %1408 = vmatpush2.msra.mxu0 0.0
  %1409 = vmatprep.subr.mxu0 0.0
  %1410 = vmatpush2.msra.mxu0 0.0
  %1411 = vmatprep.subr.mxu0 0.0
  %1412 = vmatpush2.msra.mxu0 0.0
  %1413 = vmatprep.subr.mxu0 0.0
  %1414 = vmatpush2.msra.mxu0 0.0
  %1415 = vmatprep.subr.mxu0 0.0
  %1416 = vmatpush2.msra.mxu0 0.0
  %1417 = vmatprep.subr.mxu0 0.0
  %1418 = vmatpush2.msra.mxu0 0.0
  %1419 = vmatprep.subr.mxu0 0.0
  %1420 = vmatpush2.msra.mxu0 0.0
  %1421 = vmatprep.subr.mxu0 0.0
  %1422 = vmatpush2.msra.mxu0 0.0
  %1423 = vmatprep.subr.mxu0 0.0
  %1424 = vmatpush2.msra.mxu0 0.0
  %1425 = vmatprep.subr.mxu0 0.0
  %1426 = vmatpush2.msra.mxu0 0.0
  %1427 = vmatprep.subr.mxu0 0.0
  %1428 = vmatpush2.msra.mxu0 0.0
  %1429 = vmatprep.subr.mxu0 0.0
  %1430 = vmatpush2.msra.mxu0 0.0
  %1431 = vmatprep.mubr.f32.mxu0 0.0
  %1432 = vmatmul.mubr.f32.gmra.mxu0 %v1362
  %v1433 = vpop.f32.mrf.mxu0
  %v1434 = vadd.f32 0.0, %v1433
  %v1435 = vpop.f32.mrf.mxu0
  %v1436 = vadd.f32 0.0, %v1435
  %1437 = vmatprep.mubr.f32.mxu0 0.0
  %1438 = vmatmul.mubr.f32.gmra.mxu0 %v1365
  %v1439 = vpop.f32.mrf.mxu0
  %v1440 = vadd.f32 0.0, %v1439
  %v1441 = vpop.f32.mrf.mxu0
  %v1442 = vadd.f32 0.0, %v1441
  %1443 = vdwg.mxu0
  %1444 = vmatprep.subr.mxu0 0.0
  %1445 = vmatpush1.msra.mxu0 0.0
  %1446 = vmatprep.subr.mxu0 0.0
  %1447 = vmatpush1.msra.mxu0 0.0
  %1448 = vmatprep.subr.mxu0 0.0
  %1449 = vmatpush1.msra.mxu0 0.0
  %1450 = vmatprep.subr.mxu0 0.0
  %1451 = vmatpush1.msra.mxu0 0.0
  %1452 = vmatprep.subr.mxu0 %v1360
  %1453 = vmatpush1.msra.mxu0 %v1359
  %1454 = vmatprep.subr.mxu0 %v1356
  %1455 = vmatpush1.msra.mxu0 %v1355
  %1456 = vmatprep.subr.mxu0 %v1352
  %1457 = vmatpush1.msra.mxu0 %v1351
  %1458 = vmatprep.subr.mxu0 %v1348
  %1459 = vmatpush1.msra.mxu0 %v1347
  %1460 = vmatprep.subr.mxu0 %v1296
  %1461 = vmatpush1.msra.mxu0 %v1295
  %1462 = vmatprep.subr.mxu0 %v1292
  %1463 = vmatpush1.msra.mxu0 %v1291
  %1464 = vmatprep.subr.mxu0 %v1288
  %1465 = vmatpush1.msra.mxu0 %v1287
  %1466 = vmatprep.subr.mxu0 %v1284
  %1467 = vmatpush1.msra.mxu0 %v1283
  %1468 = vmatprep.subr.mxu0 %v1232
  %1469 = vmatpush1.msra.mxu0 %v1231
  %1470 = vmatprep.subr.mxu0 %v1228
  %1471 = vmatpush1.msra.mxu0 %v1227
  %1472 = vmatprep.subr.mxu0 %v1224
  %1473 = vmatpush1.msra.mxu0 %v1223
  %1474 = vmatprep.subr.mxu0 %v1220
  %1475 = vmatpush1.msra.mxu0 %v1219
  %1476 = vmatprep.subr.mxu0 0.0
  %1477 = vmatpush2.msra.mxu0 0.0
  %1478 = vmatprep.subr.mxu0 0.0
  %1479 = vmatpush2.msra.mxu0 0.0
  %1480 = vmatprep.subr.mxu0 0.0
  %1481 = vmatpush2.msra.mxu0 0.0
  %1482 = vmatprep.subr.mxu0 0.0
  %1483 = vmatpush2.msra.mxu0 0.0
  %1484 = vmatprep.subr.mxu0 0.0
  %1485 = vmatpush2.msra.mxu0 0.0
  %1486 = vmatprep.subr.mxu0 0.0
  %1487 = vmatpush2.msra.mxu0 0.0
  %1488 = vmatprep.subr.mxu0 0.0
  %1489 = vmatpush2.msra.mxu0 0.0
  %1490 = vmatprep.subr.mxu0 0.0
  %1491 = vmatpush2.msra.mxu0 0.0
  %1492 = vmatprep.subr.mxu0 0.0
  %1493 = vmatpush2.msra.mxu0 0.0
  %1494 = vmatprep.subr.mxu0 0.0
  %1495 = vmatpush2.msra.mxu0 0.0
  %1496 = vmatprep.subr.mxu0 0.0
  %1497 = vmatpush2.msra.mxu0 0.0
  %1498 = vmatprep.subr.mxu0 0.0
  %1499 = vmatpush2.msra.mxu0 0.0
  %1500 = vmatprep.subr.mxu0 0.0
  %1501 = vmatpush2.msra.mxu0 0.0
  %1502 = vmatprep.subr.mxu0 0.0
  %1503 = vmatpush2.msra.mxu0 0.0
  %1504 = vmatprep.subr.mxu0 0.0
  %1505 = vmatpush2.msra.mxu0 0.0
  %1506 = vmatprep.subr.mxu0 0.0
  %1507 = vmatpush2.msra.mxu0 0.0
  %1508 = vmatprep.mubr.f32.mxu0 0.0
  %1509 = vmatmul.mubr.f32.gmra.mxu0 %v1362
  %v1510 = vpop.f32.mrf.mxu0
  %v1511 = vadd.f32 0.0, %v1510
  %v1512 = vpop.f32.mrf.mxu0
  %v1513 = vadd.f32 0.0, %v1512
  %1514 = vmatprep.mubr.f32.mxu0 0.0
  %1515 = vmatmul.mubr.f32.gmra.mxu0 %v1365
  %v1516 = vpop.f32.mrf.mxu0
  %v1517 = vadd.f32 0.0, %v1516
  %v1518 = vpop.f32.mrf.mxu0
  %v1519 = vadd.f32 0.0, %v1518
  %1520 = vdwg.mxu0
  %v1521 = vadd.f32 %v1079, %v1434
  %v1522 = vadd.f32 %v1081, %v1436
  %v1523 = vadd.f32 %v1156, %v1511
  %v1524 = vadd.f32 %v1158, %v1513
  %v1525 = vadd.f32 %v1085, %v1440
  %v1526 = vadd.f32 %v1087, %v1442
  %v1527 = vadd.f32 %v1162, %v1517
  %v1528 = vadd.f32 %v1164, %v1519
  %v1529 = vld [vmem:[%s5] sm:$0xff]
  %v1530 = vld [vmem:[%s5 + $0x8] sm:$0xff]
  %1532 = vset.pattern.permute.xlu0 0
  %1533 = vperm.xlu0 %1532, %v1529
  %v1534 = vpop.permute.xlu0 %1533
  %1537 = vset.pattern.permute.xlu0 0
  %1538 = vperm.xlu0 %1537, %v1530
  %v1539 = vpop.permute.xlu0 %1538
  %v1541 = vadd.f32 %v1521, %v1534
  %v1542 = vadd.f32 %v1522, %v1534
  %v1543 = vadd.f32 %v1523, %v1534
  %v1544 = vadd.f32 %v1524, %v1534
  %v1545 = vadd.f32 %v1525, %v1539
  %v1546 = vadd.f32 %v1526, %v1539
  %v1547 = vadd.f32 %v1527, %v1539
  %v1548 = vadd.f32 %v1528, %v1539
  %1549 = vst [vmem:[%s6] sm:$0xff] %v1541
  %1550 = vst [vmem:[%s6 + $0x8] sm:$0xff] %v1542
  %1551 = vst [vmem:[%s6 + $0x10] sm:$0xff] %v1543
  %1552 = vst [vmem:[%s6 + $0x18] sm:$0xff] %v1544
  %1553 = vst [vmem:[%s6 + $0x20] sm:$0xff] %v1545
  %1554 = vst [vmem:[%s6 + $0x28] sm:$0xff] %v1546
  %1555 = vst [vmem:[%s6 + $0x30] sm:$0xff] %v1547
  %1556 = vst [vmem:[%s6 + $0x38] sm:$0xff] %v1548
  // Predicated region
  $region26: #{decoder_block_forward.1} parent=0 // pred_check
    _
  $region27: #{decoder_block_forward.1} parent=0 // pred_check_branch
    %1558 = sbr.rel (0) target = $region29
  $region28: #{decoder_block_forward.1} parent=0 // pred_region
    _
  $region29: #{decoder_block_forward.1} parent=0 // pred_fallthru
    _
  // Predicated region
  $region30: #{decoder_block_forward.1} parent=0 // pred_check
    _
  $region31: #{decoder_block_forward.1} parent=0 // pred_check_branch
    %1560 = sbr.rel (0) target = $region33
  $region32: #{decoder_block_forward.1} parent=0 // pred_region
    _
  $region33: #{decoder_block_forward.1} parent=0 // pred_fallthru
    _

</llo_original>
